<compile_context>
chip_gen: v6e
topology: v6e:2x2x1
jax: 0.10.0
libtpu: 0.0.40
codegen_flags: <defaults>
</compile_context>

<pallas_src>
import functools

import jax
import jax.numpy as jnp
import numpy as np
from jax.experimental import pallas as pl
from jax.experimental.pallas import tpu as pltpu

_SQRT_2_OVER_PI = 0.7978845608028654
_EPS = 1e-5


def _gelu(x):
    # TODO(synk): PyTorch nn.GELU() defaults to the exact erf form; the tanh
    # approximation is used for robust Mosaic lowering (max abs err ~1e-3).
    return 0.5 * x * (1.0 + jnp.tanh(_SQRT_2_OVER_PI * (x + 0.044715 * x * x * x)))


def _dcaa_kernel(x_ref, w_ref, vec_ref, out_ref, *, H, W):
    """One batch element per grid step.  x is (C, HW), lane-dense."""
    HW = H * W
    inv_w = 1.0 / float(W)

    x = x_ref[...]                                                    # (C, HW)
    w1, wfq, we1, we2 = w_ref[0], w_ref[1], w_ref[2], w_ref[3]        # (C, C) each
    vec = vec_ref[...]                                                # (C, 6) packed per-channel vectors
    b1, bfq = vec[:, 0:1], vec[:, 1:2]
    bn1_s, bn1_b = vec[:, 2:3], vec[:, 3:4]
    bn2_s, bn2_b = vec[:, 4:5], vec[:, 5:6]

    # conv1 (1x1 conv == channel matmul on the MXU).
    f1 = jnp.dot(w1, x, preferred_element_type=jnp.float32) + b1      # (C, HW)

    # Membership matrix m[h, hw] = 1 iff hw // W == h, built from iota
    # (replaces the HBM-resident kron pool/broadcast constants of the old kernel).
    row_lo = jax.lax.broadcasted_iota(jnp.int32, (H, HW), 0) * W
    col = jax.lax.broadcasted_iota(jnp.int32, (H, HW), 1)
    member = jnp.where(jnp.logical_and(col >= row_lo, col < row_lo + W), 1.0, 0.0)
    member = member.astype(jnp.float32)                               # (H, HW)

    # n_avg: AdaptiveAvgPool2d((None, 1)) == mean over W (contract HW with member).
    pooled = jax.lax.dot_general(
        f1, member, (((1,), (1,)), ((), ())),
        preferred_element_type=jnp.float32) * inv_w                   # (C, H)
    g = _gelu(pooled)

    # fc_qkv: 1x1 conv (BatchNorm already folded into wfq / bfq) -> GELU.
    w2 = _gelu(jnp.dot(wfq, g, preferred_element_type=jnp.float32) + bfq)   # (C, H)

    # Confidence scores (shared conv1 weights) and confidence vector (channel sum).
    cs = jax.nn.sigmoid(jnp.dot(w1, w2, preferred_element_type=jnp.float32) + b1)  # (C, H)
    cv = jax.nn.sigmoid(jnp.sum(w2, axis=0, keepdims=True))                         # (1, H)

    # Broadcast the per-(c, h) gate back over W via member, then gate the input.
    gate = jnp.dot(cs * cv, member, preferred_element_type=jnp.float32)    # (C, HW)
    t = x * gate

    # eb: conv -> InstanceNorm -> BN(eval, folded) -> GELU -> conv -> InstanceNorm -> BN.
    # The eb conv biases are dropped (exactly cancelled by the InstanceNorm mean).
    t = jnp.dot(we1, t, preferred_element_type=jnp.float32)
    mu = jnp.mean(t, axis=1, keepdims=True)
    var = jnp.mean(jnp.square(t - mu), axis=1, keepdims=True)
    scale = jax.lax.rsqrt(var + _EPS) * bn1_s                               # (C, 1)
    t = t * scale + (bn1_b - mu * scale)
    t = _gelu(t)

    t = jnp.dot(we2, t, preferred_element_type=jnp.float32)
    mu = jnp.mean(t, axis=1, keepdims=True)
    var = jnp.mean(jnp.square(t - mu), axis=1, keepdims=True)
    scale = jax.lax.rsqrt(var + _EPS) * bn2_s
    t = t * scale + (bn2_b - mu * scale)

    # Residual + final GELU; HW multiple of 128 -> unmasked lane-dense store.
    out_ref[...] = _gelu(t + x)


def dcaa_block(x_nchw, p):
    """x_nchw: (B, C, H, W) float32; p: parameter dict (see __main__)."""
    B, C, H, W = x_nchw.shape
    HW = H * W
    # NCHW flattens directly into the kernel's (B, C, HW) layout: no transposes.
    x = x_nchw.reshape(B, C, HW).astype(jnp.float32)

    f32 = lambda v: jnp.asarray(v, jnp.float32)
    # Fold fc_qkv's eval-mode BatchNorm into its conv weight / bias.
    wfq = f32(p["wfq"]) * f32(p["fq_s"])[:, None]
    bfq = f32(p["bfq"]) * f32(p["fq_s"]) + f32(p["fq_b"])

    # Pack the four (C, C) weights and the six per-channel vectors into two
    # inputs (fewer DMA descriptors / double-buffered VMEM allocations).
    weights = jnp.stack([f32(p["w1"]), wfq, f32(p["we1"]), f32(p["we2"])])   # (4, C, C)
    vecs = jnp.stack([f32(p["b1"]), bfq, f32(p["bn1_s"]), f32(p["bn1_b"]),
                      f32(p["bn2_s"]), f32(p["bn2_b"])], axis=1)             # (C, 6)

    # NOTE: bf16 matmul operands would add ~2x MXU/bandwidth on v6e/v7x, but the
    # matmuls are f32 here to stay well inside the 2e-3 tolerance vs. the module.
    # TODO(synk): for large B, tile several samples per grid step to amortize the
    # ~0.35us/step overhead (reductions stay per-sample via keepdims on axis -1).
    out = pl.pallas_call(
        functools.partial(_dcaa_kernel, H=H, W=W),
        out_shape=jax.ShapeDtypeStruct((B, C, HW), jnp.float32),
        grid_spec=pltpu.PrefetchScalarGridSpec(
            num_scalar_prefetch=0,
            grid=(B,),
            in_specs=[
                pl.BlockSpec((None, C, HW), lambda b: (b, 0, 0)),
                pl.BlockSpec((4, C, C), lambda b: (0, 0, 0)),
                pl.BlockSpec((C, 6), lambda b: (0, 0)),
            ],
            out_specs=pl.BlockSpec((None, C, HW), lambda b: (b, 0, 0)),
        ),
        compiler_params=pltpu.CompilerParams(dimension_semantics=("parallel",)),
    )(x, weights, vecs)

    return out.reshape(B, C, H, W)


# ----------------------------- pure-JAX reference -----------------------------
def dcaa_reference(x_nchw, p):
    x = x_nchw.astype(jnp.float32)
    hi = jax.lax.Precision.HIGHEST

    def conv1x1(v, w, b):
        return (jnp.einsum("bchw,dc->bdhw", v, w, precision=hi)
                + b[None, :, None, None])

    def inorm(v):
        mu = jnp.mean(v, axis=(2, 3), keepdims=True)
        var = jnp.mean(jnp.square(v - mu), axis=(2, 3), keepdims=True)
        return (v - mu) * jax.lax.rsqrt(var + _EPS)

    def affine(v, s, b):
        return v * s[None, :, None, None] + b[None, :, None, None]

    f1 = conv1x1(x, p["w1"], p["b1"])
    pooled = jnp.mean(f1, axis=3, keepdims=True)
    w2 = _gelu(affine(conv1x1(_gelu(pooled), p["wfq"], p["bfq"]), p["fq_s"], p["fq_b"]))
    cs = jax.nn.sigmoid(conv1x1(w2, p["w1"], p["b1"]))
    cv = jax.nn.sigmoid(jnp.sum(w2, axis=1, keepdims=True))
    t = x * cs * cv
    t = affine(inorm(conv1x1(t, p["we1"], p["be1"])), p["bn1_s"], p["bn1_b"])
    t = _gelu(t)
    t = affine(inorm(conv1x1(t, p["we2"], p["be2"])), p["bn2_s"], p["bn2_b"])
    return _gelu(t + x)


def _bn_fold(gamma, beta, mean, var, eps=_EPS):
    scale = gamma / jnp.sqrt(var + eps)
    shift = beta - mean * scale
    return scale, shift


if __name__ == "__main__":
    # inchannel == outchannel is required by the module (shared conv1 + residual).
    B, C, H, W = 2, 32, 16, 16

    key = jax.random.PRNGKey(0)
    keys = jax.random.split(key, 8)
    x = jax.random.normal(keys[0], (B, C, H, W), jnp.float32)

    def conv_init(k, cin, cout):
        bound = 1.0 / np.sqrt(cin)
        kw, kb = jax.random.split(k)
        w = jax.random.uniform(kw, (cout, cin), jnp.float32, -bound, bound)
        b = jax.random.uniform(kb, (cout,), jnp.float32, -bound, bound)
        return w, b

    def bn_init(k, c):
        # Eval-mode BatchNorm with non-trivial learned affine + running stats,
        # folded into a per-channel scale/shift (exercises the kernel's folds).
        kg, kb, km, kv = jax.random.split(k, 4)
        gamma = jax.random.uniform(kg, (c,), jnp.float32, 0.5, 1.5)
        beta = 0.1 * jax.random.normal(kb, (c,), jnp.float32)
        rmean = 0.1 * jax.random.normal(km, (c,), jnp.float32)
        rvar = jax.random.uniform(kv, (c,), jnp.float32, 0.5, 1.5)
        return _bn_fold(gamma, beta, rmean, rvar)

    w1, b1 = conv_init(keys[1], C, C)
    wfq, bfq = conv_init(keys[2], C, C)
    we1, be1 = conv_init(keys[3], C, C)
    we2, be2 = conv_init(keys[4], C, C)
    fq_s, fq_b = bn_init(keys[5], C)
    bn1_s, bn1_b = bn_init(keys[6], C)
    bn2_s, bn2_b = bn_init(keys[7], C)

    params = dict(w1=w1, b1=b1, wfq=wfq, bfq=bfq, fq_s=fq_s, fq_b=fq_b,
                  we1=we1, be1=be1, bn1_s=bn1_s, bn1_b=bn1_b,
                  we2=we2, be2=be2, bn2_s=bn2_s, bn2_b=bn2_b)

    out = jax.block_until_ready(dcaa_block(x, params))
    ref = jax.block_until_ready(dcaa_reference(x, params))
    np.testing.assert_allclose(np.asarray(out), np.asarray(ref), rtol=2e-3, atol=2e-3)
    print("KERNEL_OK")
</pallas_src>

<mosaic_0001>
module attributes {stable_mosaic.version = 11 : i64} {
  func.func @_dcaa_kernel(%arg0: i32, %arg1: memref<1x32x256xf32, #tpu.memory_space<vmem>>, %arg2: memref<4x32x32xf32, #tpu.memory_space<vmem>>, %arg3: memref<32x6xf32, #tpu.memory_space<vmem>>, %arg4: memref<1x32x256xf32, #tpu.memory_space<vmem>>) attributes {dimension_semantics = [#tpu.dimension_semantics<parallel>], iteration_bounds = array<i64: 2>, scalar_prefetch = 0 : i64, scratch_operands = 0 : i64, tpu.core_type = #tpu.core_type<tc>, window_params = [{transform_indices = @transform_0, window_bounds = array<i64: 1, 32, 256>}, {pipeline_mode = #tpu.pipeline_mode<synchronous>, transform_indices = @transform_1, window_bounds = array<i64: 4, 32, 32>}, {pipeline_mode = #tpu.pipeline_mode<synchronous>, transform_indices = @transform_2, window_bounds = array<i64: 32, 6>}, {transform_indices = @transform_3, window_bounds = array<i64: 1, 32, 256>}]} {
    %c0 = arith.constant 0 : index
    %c0_0 = arith.constant 0 : index
    %c0_1 = arith.constant 0 : index
    %0 = vector.load %arg1[%c0, %c0_0, %c0_1] : memref<1x32x256xf32, #tpu.memory_space<vmem>>, vector<1x32x256xf32>
    %1 = vector.shape_cast %0 : vector<1x32x256xf32> to vector<32x256xf32>
    %c0_2 = arith.constant 0 : index
    %c0_3 = arith.constant 0 : index
    %c0_4 = arith.constant 0 : index
    %2 = vector.load %arg2[%c0_2, %c0_3, %c0_4] : memref<4x32x32xf32, #tpu.memory_space<vmem>>, vector<1x32x32xf32>
    %3 = vector.shape_cast %2 : vector<1x32x32xf32> to vector<32x32xf32>
    %c1 = arith.constant 1 : index
    %c0_5 = arith.constant 0 : index
    %c0_6 = arith.constant 0 : index
    %4 = vector.load %arg2[%c1, %c0_5, %c0_6] : memref<4x32x32xf32, #tpu.memory_space<vmem>>, vector<1x32x32xf32>
    %5 = vector.shape_cast %4 : vector<1x32x32xf32> to vector<32x32xf32>
    %c2 = arith.constant 2 : index
    %c0_7 = arith.constant 0 : index
    %c0_8 = arith.constant 0 : index
    %6 = vector.load %arg2[%c2, %c0_7, %c0_8] : memref<4x32x32xf32, #tpu.memory_space<vmem>>, vector<1x32x32xf32>
    %7 = vector.shape_cast %6 : vector<1x32x32xf32> to vector<32x32xf32>
    %c3 = arith.constant 3 : index
    %c0_9 = arith.constant 0 : index
    %c0_10 = arith.constant 0 : index
    %8 = vector.load %arg2[%c3, %c0_9, %c0_10] : memref<4x32x32xf32, #tpu.memory_space<vmem>>, vector<1x32x32xf32>
    %9 = vector.shape_cast %8 : vector<1x32x32xf32> to vector<32x32xf32>
    %c0_11 = arith.constant 0 : index
    %c0_12 = arith.constant 0 : index
    %10 = vector.load %arg3[%c0_11, %c0_12] : memref<32x6xf32, #tpu.memory_space<vmem>>, vector<32x6xf32>
    %11 = vector.extract_strided_slice %10 {offsets = [0, 0], sizes = [32, 1], strides = [1, 1]} : vector<32x6xf32> to vector<32x1xf32>
    %12 = vector.extract_strided_slice %10 {offsets = [0, 1], sizes = [32, 1], strides = [1, 1]} : vector<32x6xf32> to vector<32x1xf32>
    %13 = vector.extract_strided_slice %10 {offsets = [0, 2], sizes = [32, 1], strides = [1, 1]} : vector<32x6xf32> to vector<32x1xf32>
    %14 = vector.extract_strided_slice %10 {offsets = [0, 3], sizes = [32, 1], strides = [1, 1]} : vector<32x6xf32> to vector<32x1xf32>
    %15 = vector.extract_strided_slice %10 {offsets = [0, 4], sizes = [32, 1], strides = [1, 1]} : vector<32x6xf32> to vector<32x1xf32>
    %16 = vector.extract_strided_slice %10 {offsets = [0, 5], sizes = [32, 1], strides = [1, 1]} : vector<32x6xf32> to vector<32x1xf32>
    %cst = arith.constant dense<0.000000e+00> : vector<32x256xf32>
    %17 = tpu.matmul %3, %1, %cst {dimension_numbers = #tpu.dot_dimension_numbers<[1], [0], [0], [1], [0, 0, 1, 1], [], []>} : vector<32x32xf32>, vector<32x256xf32>, vector<32x256xf32> -> vector<32x256xf32>
    %18 = vector.broadcast %11 : vector<32x1xf32> to vector<32x256xf32>
    %19 = arith.addf %17, %18 : vector<32x256xf32>
    %20 = tpu.iota {dimensions = array<i32: 0>} : vector<16x256xi32>
    %c16_i32 = arith.constant 16 : i32
    %21 = vector.broadcast %c16_i32 : i32 to vector<16x256xi32>
    %22 = arith.muli %20, %21 : vector<16x256xi32>
    %23 = tpu.iota {dimensions = array<i32: 1>} : vector<16x256xi32>
    %24 = arith.cmpi sge, %23, %22 : vector<16x256xi32>
    %c16_i32_13 = arith.constant 16 : i32
    %25 = vector.broadcast %c16_i32_13 : i32 to vector<16x256xi32>
    %26 = arith.addi %22, %25 : vector<16x256xi32>
    %27 = arith.cmpi slt, %23, %26 : vector<16x256xi32>
    %28 = arith.andi %24, %27 : vector<16x256xi1>
    %cst_14 = arith.constant 1.000000e+00 : f32
    %cst_15 = arith.constant 0.000000e+00 : f32
    %29 = vector.broadcast %cst_14 : f32 to vector<16x256xf32>
    %30 = vector.broadcast %cst_15 : f32 to vector<16x256xf32>
    %31 = arith.select %28, %29, %30 : vector<16x256xi1>, vector<16x256xf32>
    %cst_16 = arith.constant dense<0.000000e+00> : vector<32x16xf32>
    %32 = tpu.matmul %19, %31, %cst_16 {dimension_numbers = #tpu.dot_dimension_numbers<[1], [1], [0], [0], [0, 0, 1, 0], [], []>} : vector<32x256xf32>, vector<16x256xf32>, vector<32x16xf32> -> vector<32x16xf32>
    %cst_17 = arith.constant 6.250000e-02 : f32
    %33 = vector.broadcast %cst_17 : f32 to vector<32x16xf32>
    %34 = arith.mulf %32, %33 : vector<32x16xf32>
    %cst_18 = arith.constant 5.000000e-01 : f32
    %35 = vector.broadcast %cst_18 : f32 to vector<32x16xf32>
    %36 = arith.mulf %35, %34 : vector<32x16xf32>
    %cst_19 = arith.constant 4.471500e-02 : f32
    %37 = vector.broadcast %cst_19 : f32 to vector<32x16xf32>
    %38 = arith.mulf %37, %34 : vector<32x16xf32>
    %39 = arith.mulf %38, %34 : vector<32x16xf32>
    %40 = arith.mulf %39, %34 : vector<32x16xf32>
    %41 = arith.addf %34, %40 : vector<32x16xf32>
    %cst_20 = arith.constant 0.797884583 : f32
    %42 = vector.broadcast %cst_20 : f32 to vector<32x16xf32>
    %43 = arith.mulf %42, %41 : vector<32x16xf32>
    %44 = math.tanh %43 : vector<32x16xf32>
    %cst_21 = arith.constant 1.000000e+00 : f32
    %45 = vector.broadcast %cst_21 : f32 to vector<32x16xf32>
    %46 = arith.addf %45, %44 : vector<32x16xf32>
    %47 = arith.mulf %36, %46 : vector<32x16xf32>
    %cst_22 = arith.constant dense<0.000000e+00> : vector<32x16xf32>
    %48 = tpu.matmul %5, %47, %cst_22 {dimension_numbers = #tpu.dot_dimension_numbers<[1], [0], [0], [1], [0, 0, 1, 1], [], []>} : vector<32x32xf32>, vector<32x16xf32>, vector<32x16xf32> -> vector<32x16xf32>
    %49 = vector.broadcast %12 : vector<32x1xf32> to vector<32x16xf32>
    %50 = arith.addf %48, %49 : vector<32x16xf32>
    %cst_23 = arith.constant 5.000000e-01 : f32
    %51 = vector.broadcast %cst_23 : f32 to vector<32x16xf32>
    %52 = arith.mulf %51, %50 : vector<32x16xf32>
    %cst_24 = arith.constant 4.471500e-02 : f32
    %53 = vector.broadcast %cst_24 : f32 to vector<32x16xf32>
    %54 = arith.mulf %53, %50 : vector<32x16xf32>
    %55 = arith.mulf %54, %50 : vector<32x16xf32>
    %56 = arith.mulf %55, %50 : vector<32x16xf32>
    %57 = arith.addf %50, %56 : vector<32x16xf32>
    %cst_25 = arith.constant 0.797884583 : f32
    %58 = vector.broadcast %cst_25 : f32 to vector<32x16xf32>
    %59 = arith.mulf %58, %57 : vector<32x16xf32>
    %60 = math.tanh %59 : vector<32x16xf32>
    %cst_26 = arith.constant 1.000000e+00 : f32
    %61 = vector.broadcast %cst_26 : f32 to vector<32x16xf32>
    %62 = arith.addf %61, %60 : vector<32x16xf32>
    %63 = arith.mulf %52, %62 : vector<32x16xf32>
    %cst_27 = arith.constant dense<0.000000e+00> : vector<32x16xf32>
    %64 = tpu.matmul %3, %63, %cst_27 {dimension_numbers = #tpu.dot_dimension_numbers<[1], [0], [0], [1], [0, 0, 1, 1], [], []>} : vector<32x32xf32>, vector<32x16xf32>, vector<32x16xf32> -> vector<32x16xf32>
    %65 = vector.broadcast %11 : vector<32x1xf32> to vector<32x16xf32>
    %66 = arith.addf %64, %65 : vector<32x16xf32>
    %67 = arith.negf %66 : vector<32x16xf32>
    %68 = math.exp %67 : vector<32x16xf32>
    %cst_28 = arith.constant 1.000000e+00 : f32
    %69 = vector.broadcast %cst_28 : f32 to vector<32x16xf32>
    %70 = arith.addf %69, %68 : vector<32x16xf32>
    %71 = arith.divf %69, %70 : vector<32x16xf32>
    %cst_29 = arith.constant dense<0.000000e+00> : vector<16xf32>
    %72 = vector.multi_reduction <add>, %63, %cst_29 [0] : vector<32x16xf32> to vector<16xf32>
    %73 = vector.shape_cast %72 : vector<16xf32> to vector<1x16xf32>
    %74 = arith.negf %73 : vector<1x16xf32>
    %75 = math.exp %74 : vector<1x16xf32>
    %cst_30 = arith.constant 1.000000e+00 : f32
    %76 = vector.broadcast %cst_30 : f32 to vector<1x16xf32>
    %77 = arith.addf %76, %75 : vector<1x16xf32>
    %78 = arith.divf %76, %77 : vector<1x16xf32>
    %79 = vector.broadcast %78 : vector<1x16xf32> to vector<32x16xf32>
    %80 = arith.mulf %71, %79 : vector<32x16xf32>
    %cst_31 = arith.constant dense<0.000000e+00> : vector<32x256xf32>
    %81 = tpu.matmul %80, %31, %cst_31 {dimension_numbers = #tpu.dot_dimension_numbers<[1], [0], [0], [1], [0, 0, 1, 1], [], []>} : vector<32x16xf32>, vector<16x256xf32>, vector<32x256xf32> -> vector<32x256xf32>
    %82 = arith.mulf %1, %81 : vector<32x256xf32>
    %cst_32 = arith.constant dense<0.000000e+00> : vector<32x256xf32>
    %83 = tpu.matmul %7, %82, %cst_32 {dimension_numbers = #tpu.dot_dimension_numbers<[1], [0], [0], [1], [0, 0, 1, 1], [], []>} : vector<32x32xf32>, vector<32x256xf32>, vector<32x256xf32> -> vector<32x256xf32>
    %cst_33 = arith.constant dense<0.000000e+00> : vector<32xf32>
    %84 = vector.multi_reduction <add>, %83, %cst_33 [1] : vector<32x256xf32> to vector<32xf32>
    %85 = vector.shape_cast %84 : vector<32xf32> to vector<32x1xf32>
    %cst_34 = arith.constant 2.560000e+02 : f32
    %86 = vector.broadcast %cst_34 : f32 to vector<32x1xf32>
    %87 = arith.divf %85, %86 : vector<32x1xf32>
    %88 = vector.broadcast %87 : vector<32x1xf32> to vector<32x256xf32>
    %89 = arith.subf %83, %88 : vector<32x256xf32>
    %90 = arith.mulf %89, %89 : vector<32x256xf32>
    %cst_35 = arith.constant dense<0.000000e+00> : vector<32xf32>
    %91 = vector.multi_reduction <add>, %90, %cst_35 [1] : vector<32x256xf32> to vector<32xf32>
    %92 = vector.shape_cast %91 : vector<32xf32> to vector<32x1xf32>
    %cst_36 = arith.constant 2.560000e+02 : f32
    %93 = vector.broadcast %cst_36 : f32 to vector<32x1xf32>
    %94 = arith.divf %92, %93 : vector<32x1xf32>
    %cst_37 = arith.constant 9.99999974E-6 : f32
    %95 = vector.broadcast %cst_37 : f32 to vector<32x1xf32>
    %96 = arith.addf %94, %95 : vector<32x1xf32>
    %97 = math.rsqrt %96 : vector<32x1xf32>
    %98 = arith.mulf %97, %13 : vector<32x1xf32>
    %99 = vector.broadcast %98 : vector<32x1xf32> to vector<32x256xf32>
    %100 = arith.mulf %83, %99 : vector<32x256xf32>
    %101 = arith.mulf %87, %98 : vector<32x1xf32>
    %102 = arith.subf %14, %101 : vector<32x1xf32>
    %103 = vector.broadcast %102 : vector<32x1xf32> to vector<32x256xf32>
    %104 = arith.addf %100, %103 : vector<32x256xf32>
    %cst_38 = arith.constant 5.000000e-01 : f32
    %105 = vector.broadcast %cst_38 : f32 to vector<32x256xf32>
    %106 = arith.mulf %105, %104 : vector<32x256xf32>
    %cst_39 = arith.constant 4.471500e-02 : f32
    %107 = vector.broadcast %cst_39 : f32 to vector<32x256xf32>
    %108 = arith.mulf %107, %104 : vector<32x256xf32>
    %109 = arith.mulf %108, %104 : vector<32x256xf32>
    %110 = arith.mulf %109, %104 : vector<32x256xf32>
    %111 = arith.addf %104, %110 : vector<32x256xf32>
    %cst_40 = arith.constant 0.797884583 : f32
    %112 = vector.broadcast %cst_40 : f32 to vector<32x256xf32>
    %113 = arith.mulf %112, %111 : vector<32x256xf32>
    %114 = math.tanh %113 : vector<32x256xf32>
    %cst_41 = arith.constant 1.000000e+00 : f32
    %115 = vector.broadcast %cst_41 : f32 to vector<32x256xf32>
    %116 = arith.addf %115, %114 : vector<32x256xf32>
    %117 = arith.mulf %106, %116 : vector<32x256xf32>
    %cst_42 = arith.constant dense<0.000000e+00> : vector<32x256xf32>
    %118 = tpu.matmul %9, %117, %cst_42 {dimension_numbers = #tpu.dot_dimension_numbers<[1], [0], [0], [1], [0, 0, 1, 1], [], []>} : vector<32x32xf32>, vector<32x256xf32>, vector<32x256xf32> -> vector<32x256xf32>
    %cst_43 = arith.constant dense<0.000000e+00> : vector<32xf32>
    %119 = vector.multi_reduction <add>, %118, %cst_43 [1] : vector<32x256xf32> to vector<32xf32>
    %120 = vector.shape_cast %119 : vector<32xf32> to vector<32x1xf32>
    %cst_44 = arith.constant 2.560000e+02 : f32
    %121 = vector.broadcast %cst_44 : f32 to vector<32x1xf32>
    %122 = arith.divf %120, %121 : vector<32x1xf32>
    %123 = vector.broadcast %122 : vector<32x1xf32> to vector<32x256xf32>
    %124 = arith.subf %118, %123 : vector<32x256xf32>
    %125 = arith.mulf %124, %124 : vector<32x256xf32>
    %cst_45 = arith.constant dense<0.000000e+00> : vector<32xf32>
    %126 = vector.multi_reduction <add>, %125, %cst_45 [1] : vector<32x256xf32> to vector<32xf32>
    %127 = vector.shape_cast %126 : vector<32xf32> to vector<32x1xf32>
    %cst_46 = arith.constant 2.560000e+02 : f32
    %128 = vector.broadcast %cst_46 : f32 to vector<32x1xf32>
    %129 = arith.divf %127, %128 : vector<32x1xf32>
    %cst_47 = arith.constant 9.99999974E-6 : f32
    %130 = vector.broadcast %cst_47 : f32 to vector<32x1xf32>
    %131 = arith.addf %129, %130 : vector<32x1xf32>
    %132 = math.rsqrt %131 : vector<32x1xf32>
    %133 = arith.mulf %132, %15 : vector<32x1xf32>
    %134 = vector.broadcast %133 : vector<32x1xf32> to vector<32x256xf32>
    %135 = arith.mulf %118, %134 : vector<32x256xf32>
    %136 = arith.mulf %122, %133 : vector<32x1xf32>
    %137 = arith.subf %16, %136 : vector<32x1xf32>
    %138 = vector.broadcast %137 : vector<32x1xf32> to vector<32x256xf32>
    %139 = arith.addf %135, %138 : vector<32x256xf32>
    %140 = arith.addf %139, %1 : vector<32x256xf32>
    %cst_48 = arith.constant 5.000000e-01 : f32
    %141 = vector.broadcast %cst_48 : f32 to vector<32x256xf32>
    %142 = arith.mulf %141, %140 : vector<32x256xf32>
    %cst_49 = arith.constant 4.471500e-02 : f32
    %143 = vector.broadcast %cst_49 : f32 to vector<32x256xf32>
    %144 = arith.mulf %143, %140 : vector<32x256xf32>
    %145 = arith.mulf %144, %140 : vector<32x256xf32>
    %146 = arith.mulf %145, %140 : vector<32x256xf32>
    %147 = arith.addf %140, %146 : vector<32x256xf32>
    %cst_50 = arith.constant 0.797884583 : f32
    %148 = vector.broadcast %cst_50 : f32 to vector<32x256xf32>
    %149 = arith.mulf %148, %147 : vector<32x256xf32>
    %150 = math.tanh %149 : vector<32x256xf32>
    %cst_51 = arith.constant 1.000000e+00 : f32
    %151 = vector.broadcast %cst_51 : f32 to vector<32x256xf32>
    %152 = arith.addf %151, %150 : vector<32x256xf32>
    %153 = arith.mulf %142, %152 : vector<32x256xf32>
    %c0_52 = arith.constant 0 : index
    %c0_53 = arith.constant 0 : index
    %c0_54 = arith.constant 0 : index
    %154 = vector.load %arg4[%c0_52, %c0_53, %c0_54] : memref<1x32x256xf32, #tpu.memory_space<vmem>>, vector<1x32x256xf32>
    %155 = vector.shape_cast %154 : vector<1x32x256xf32> to vector<32x256xf32>
    %156 = vector.shape_cast %153 : vector<32x256xf32> to vector<1x32x256xf32>
    tpu.vector_store %arg4[%c0_52, %c0_53, %c0_54], %156 {strides = array<i32>} : memref<1x32x256xf32, #tpu.memory_space<vmem>>, vector<1x32x256xf32>,
    return
  }
  func.func @transform_0(%arg0: i32) -> (i32, i32, i32) {
    %c0_i32 = arith.constant 0 : i32
    %c0_i32_0 = arith.constant 0 : i32
    %c0_i32_1 = arith.constant 0 : i32
    return %arg0, %c0_i32, %c0_i32_0 : i32, i32, i32
  }
  func.func @transform_1(%arg0: i32) -> (i32, i32, i32) {
    %c0_i32 = arith.constant 0 : i32
    %c0_i32_0 = arith.constant 0 : i32
    %c0_i32_1 = arith.constant 0 : i32
    %c0_i32_2 = arith.constant 0 : i32
    return %c0_i32, %c0_i32_0, %c0_i32_1 : i32, i32, i32
  }
  func.func @transform_2(%arg0: i32) -> (i32, i32) {
    %c0_i32 = arith.constant 0 : i32
    %c0_i32_0 = arith.constant 0 : i32
    %c0_i32_1 = arith.constant 0 : i32
    return %c0_i32, %c0_i32_0 : i32, i32
  }
  func.func @transform_3(%arg0: i32) -> (i32, i32, i32) {
    %c0_i32 = arith.constant 0 : i32
    %c0_i32_0 = arith.constant 0 : i32
    %c0_i32_1 = arith.constant 0 : i32
    return %arg0, %c0_i32, %c0_i32_0 : i32, i32, i32
  }
}

</mosaic_0001>

<llo_original>
// kernel: tpu_custom_call.1
$region0: #{tpu_custom_call.1}
  #allocation0 [shape = 'u32[]', space=smem, size = 0x4, offset = 0x4, fixed_abs, tag = 'smem constant byte address 0x4 - core index']
  #allocation1 [shape = 'u32[144,128]{1,0:T(1,128)}', space=vmem, size = 0x12000, scoped, tag = 'internal scratch']
  %s0 = inlined_call_operand.hbm [shape: f32[2,32,256], index: 0, kind: input, shape index: {}]
  %s1 = inlined_call_operand.hbm [shape: f32[4,32,32], index: 1, kind: input, shape index: {}]
  %s2 = inlined_call_operand.vmem [shape: f32[32,6], index: 2, kind: input, shape index: {}]
  %s3 = inlined_call_operand.hbm [shape: f32[2,32,256], index: 3, kind: output, shape index: {}]
  %s4 = sld [smem:[#allocation0]]
  $region53: #{tpu_custom_call.1} parent=0
    _
  %s6 = ssub.s32 1, %s4
  %s7 = scalar_select 0, %s6, %s4
  $region1: #{tpu_custom_call.1} parent=0
    #allocation2 [shape = 'u8[65536]{0}', space=vmem, size = 0x10000, scoped, tag = 'input window, operand 0']
    #allocation3 [shape = 's32[2]{0}', space=sflag, size = 0x8, scoped, tag = 'scoped memory for tpu_custom_call.1']
    #allocation4 [shape = 's32[2]{0}', space=sflag, size = 0x8, scoped, tag = 'scoped memory for tpu_custom_call.1']
    #allocation5 [shape = 'u8[65536]{0}', space=vmem, size = 0x10000, scoped, tag = 'input window, operand 1, single buffered']
    #allocation6 [shape = 's32[1]{0}', space=sflag, size = 0x4, scoped, tag = 'scoped memory for tpu_custom_call.1']
    #allocation7 [shape = 'u8[65536]{0}', space=vmem, size = 0x10000, scoped, tag = 'output window, operand 0']
    %8 = vsyncpa [#allocation3], 0
    %s9 = scalar_lea.sflag [#allocation3], 1
    %10 = vsyncpa %s9, 0
    %11 = vsyncpa [#allocation6], 0
    %12 = vsyncpa [#allocation4], 0
    %s13 = scalar_lea.sflag [#allocation4], 1
    %14 = vsyncpa %s13, 0
    loop: start=0, step=1, limit=4
    $region2: #{tpu_custom_call.1} parent=1 // loop_pre_header
      _
    $region3: #{tpu_custom_call.1} parent=1 // loop_header
      %s16 = sphi 0, %s20
      %p17 = scmp.ge.s32.totalorder %s16, 4
      %s26 = sphi 0, %s28
      %s29 = sphi 0, %s26
      %s30 = sphi 0, %s29
      %s46 = sphi 0, %s30
      %s50 = sphi 0, %s50
      %s52 = sphi 0, %s50
      %s53 = sphi 0, %s52
      %s67 = sphi 0, %s53
      %s71 = sphi 0, %s71
      %s73 = sphi 0, %s71
      %s74 = sphi 0, %s73
      %s88 = sphi 0, %s74
      %s94 = sphi 0, %s96
      %s97 = sphi 0, %s94
      %s98 = sphi 0, %s97
      %s114 = sphi 0, %s98
    $region4: #{tpu_custom_call.1} parent=1 // loop_header_branch
      %19 = sbr.rel (%p17) target = $region8
    $region5: #{tpu_custom_call.1} parent=1 // loop_body
      %s21 = ssub.s32 %s16, 1
      %s22 = ssub.s32 %s16, 2
      %s23 = sadd.s32 %s16, 1
      %s24 = ssub.s32 %s16, %s23
      %p25 = scmp.eq.s32.totalorder %s24, 0
      %s27 = sadd.s32 %s26, 1
      %s28 = scalar_select %p25, %s26, %s27
      %p31 = pneg %p25
      %p32 = scmp.eq.s32.totalorder %s16, 1
      %p33 = por %p31, %p32
      %p34 = scmp.ne.s32.totalorder %s26, %s29
      %p35 = scmp.eq.s32.totalorder %s16, 0
      %p36 = por %p34, %p35
      %p37 = scmp.ne.s32.totalorder %s26, %s29
      %p38 = scmp.eq.s32.totalorder %s21, 1
      %p39 = por %p37, %p38
      %p40 = scmp.ne.s32.totalorder %s29, %s30
      %p41 = scmp.eq.s32.totalorder %s21, 0
      %p42 = por %p40, %p41
      %p43 = scmp.ne.s32.totalorder %s29, %s30
      %p44 = scmp.eq.s32.totalorder %s22, 1
      %p45 = por %p43, %p44
      %p47 = scmp.ne.s32.totalorder %s30, %s46
      %p48 = scmp.eq.s32.totalorder %s22, 0
      %p49 = por %p47, %p48
      %s51 = sadd.s32 %s50, 1
      %p54 = scmp.eq.s32.totalorder %s16, 1
      %p55 = scmp.ne.s32.totalorder %s50, %s52
      %p56 = scmp.eq.s32.totalorder %s16, 0
      %p57 = por %p55, %p56
      %p58 = scmp.ne.s32.totalorder %s50, %s52
      %p59 = scmp.eq.s32.totalorder %s21, 1
      %p60 = por %p58, %p59
      %p61 = scmp.ne.s32.totalorder %s52, %s53
      %p62 = scmp.eq.s32.totalorder %s21, 0
      %p63 = por %p61, %p62
      %p64 = scmp.ne.s32.totalorder %s52, %s53
      %p65 = scmp.eq.s32.totalorder %s22, 1
      %p66 = por %p64, %p65
      %p68 = scmp.ne.s32.totalorder %s53, %s67
      %p69 = scmp.eq.s32.totalorder %s22, 0
      %p70 = por %p68, %p69
      %s72 = sadd.s32 %s71, 1
      %p75 = scmp.eq.s32.totalorder %s16, 1
      %p76 = scmp.ne.s32.totalorder %s71, %s73
      %p77 = scmp.eq.s32.totalorder %s16, 0
      %p78 = por %p76, %p77
      %p79 = scmp.ne.s32.totalorder %s71, %s73
      %p80 = scmp.eq.s32.totalorder %s21, 1
      %p81 = por %p79, %p80
      %p82 = scmp.ne.s32.totalorder %s73, %s74
      %p83 = scmp.eq.s32.totalorder %s21, 0
      %p84 = por %p82, %p83
      %p85 = scmp.ne.s32.totalorder %s73, %s74
      %p86 = scmp.eq.s32.totalorder %s22, 1
      %p87 = por %p85, %p86
      %p89 = scmp.ne.s32.totalorder %s74, %s88
      %p90 = scmp.eq.s32.totalorder %s22, 0
      %p91 = por %p89, %p90
      %s92 = ssub.s32 %s16, %s23
      %p93 = scmp.eq.s32.totalorder %s92, 0
      %s95 = sadd.s32 %s94, 1
      %s96 = scalar_select %p93, %s94, %s95
      %p99 = pneg %p93
      %p100 = scmp.eq.s32.totalorder %s16, 1
      %p101 = por %p99, %p100
      %p102 = scmp.ne.s32.totalorder %s94, %s97
      %p103 = scmp.eq.s32.totalorder %s16, 0
      %p104 = por %p102, %p103
      %p105 = scmp.ne.s32.totalorder %s94, %s97
      %p106 = scmp.eq.s32.totalorder %s21, 1
      %p107 = por %p105, %p106
      %p108 = scmp.ne.s32.totalorder %s97, %s98
      %p109 = scmp.eq.s32.totalorder %s21, 0
      %p110 = por %p108, %p109
      %p111 = scmp.ne.s32.totalorder %s97, %s98
      %p112 = scmp.eq.s32.totalorder %s22, 1
      %p113 = por %p111, %p112
      %p115 = scmp.ne.s32.totalorder %s98, %s114
      %p116 = scmp.eq.s32.totalorder %s22, 0
      %p117 = por %p115, %p116
      %p118 = scmp.le.s32.totalorder 1, %s16
      %p119 = scmp.lt.s32.totalorder %s16, 3
      %p120 = pnand %p118, %p119
      %p121 = pneg %p120
      // Predicated region
      $region9: #{tpu_custom_call.1} parent=5 // pred_check
        _
      $region10: #{tpu_custom_call.1} parent=5 // pred_check_branch
        %123 = sbr.rel (%p120) target = $region12
      $region11: #{tpu_custom_call.1} parent=5 // pred_region
        %s124 = ssub.s32 %s16, 1
        // Predicated region
        $region13: #{tpu_custom_call.1} parent=11 // pred_check
          %p125 = pneg %p63
        $region14: #{tpu_custom_call.1} parent=11 // pred_check_branch
          %127 = sbr.rel (%p125) target = $region16
        $region15: #{tpu_custom_call.1} parent=11 // pred_region
          %s129 = ssub.s32 2048, 2048
          %130 = vsyncadd [#allocation6], %s129
          %s131 = sshll.u32 [#allocation5], 4
          %s132 = int_to_ptr.vmem [resolvable:$true] %s131
          %137 = dma.hbm_to_vmem [thread:$0]  %s1, 2048, %s132, [#allocation6], 128, 128, 8
        $region16: #{tpu_custom_call.1} parent=11 // pred_fallthru
          _
        // Predicated region
        $region17: #{tpu_custom_call.1} parent=11 // pred_check
          %p138 = pneg %p84
        $region18: #{tpu_custom_call.1} parent=11 // pred_check_branch
          %140 = sbr.rel (%p138) target = $region20
        $region19: #{tpu_custom_call.1} parent=11 // pred_region
          _
        $region20: #{tpu_custom_call.1} parent=11 // pred_fallthru
          _
      $region12: #{tpu_custom_call.1} parent=5 // pred_fallthru
        _
      %p141 = scmp.lt.s32.totalorder %s16, 2
      // Predicated region
      $region21: #{tpu_custom_call.1} parent=5 // pred_check
        %p142 = pneg %p141
      $region22: #{tpu_custom_call.1} parent=5 // pred_check_branch
        %144 = sbr.rel (%p142) target = $region24
      $region23: #{tpu_custom_call.1} parent=5 // pred_region
        // Predicated region
        $region25: #{tpu_custom_call.1} parent=23 // pred_check
          %p145 = pneg %p36
        $region26: #{tpu_custom_call.1} parent=23 // pred_check_branch
          %147 = sbr.rel (%p145) target = $region28
        $region27: #{tpu_custom_call.1} parent=23 // pred_region
          %s148 = sand.u32 %s26, 1
          %s149 = scalar_lea.sflag [#allocation3], %s148
          %s150 = sand.u32 %s26, 1
          %s151 = smul.addr %s150, 64
          %s152 = scalar_lea.vmem [#allocation2], %s151
          %s154 = ssub.s32 1024, 1024
          %155 = vsyncadd %s149, %s154
          %s156 = smul.addr %s16, 8
          %s157 = smul.addr %s156, 128
          %s158 = scalar_lea.hbm %s0, %s157
          %s159 = sshll.u32 %s152, 4
          %s160 = int_to_ptr.vmem [resolvable:$true] %s159
          %165 = dma.hbm_to_vmem [thread:$0]  %s158, 1024, %s160, %s149, 256, 256, 16
        $region28: #{tpu_custom_call.1} parent=23 // pred_fallthru
          _
      $region24: #{tpu_custom_call.1} parent=5 // pred_fallthru
        _
      %p166 = scmp.le.s32.totalorder 1, %s16
      %p167 = scmp.lt.s32.totalorder %s16, 3
      %p168 = pnand %p166, %p167
      %p169 = pneg %p168
      // Predicated region
      $region29: #{tpu_custom_call.1} parent=5 // pred_check
        _
      $region30: #{tpu_custom_call.1} parent=5 // pred_check_branch
        %171 = sbr.rel (%p168) target = $region32
      $region31: #{tpu_custom_call.1} parent=5 // pred_region
        %s172 = ssub.s32 %s16, 1
        %s173 = sand.u32 %s29, 1
        %s174 = scalar_lea.sflag [#allocation3], %s173
        %s175 = sand.u32 %s29, 1
        %s176 = smul.addr %s175, 64
        %s177 = scalar_lea.vmem [#allocation2], %s176
        // Predicated region
        $region33: #{tpu_custom_call.1} parent=31 // pred_check
          %p178 = pneg %p42
        $region34: #{tpu_custom_call.1} parent=31 // pred_check_branch
          %180 = sbr.rel (%p178) target = $region36
        $region35: #{tpu_custom_call.1} parent=31 // pred_region
          %181 = dma.done %s174, 1024
        $region36: #{tpu_custom_call.1} parent=31 // pred_fallthru
          _
        // Predicated region
        $region37: #{tpu_custom_call.1} parent=31 // pred_check
          %p182 = pneg %p63
        $region38: #{tpu_custom_call.1} parent=31 // pred_check_branch
          %184 = sbr.rel (%p182) target = $region40
        $region39: #{tpu_custom_call.1} parent=31 // pred_region
          %185 = dma.done [#allocation6], 2048
        $region40: #{tpu_custom_call.1} parent=31 // pred_fallthru
          _
        %s186 = sand.u32 %s29, 1
        %s187 = scalar_lea.sflag [#allocation3], %s186
        %s188 = sand.u32 %s29, 1
        %s189 = smul.addr %s188, 64
        %s190 = scalar_lea.vmem [#allocation2], %s189
        %p191 = pneg %p42
        %p192 = pneg %p39
        %p193 = pneg %p63
        %p194 = pneg %p60
        %p195 = pneg %p84
        %p196 = pneg %p81
        %p197 = pneg %p110
        %p198 = pneg %p107
        %s199 = sand.u32 %s97, 1
        %s200 = scalar_lea.sflag [#allocation4], %s199
        %s201 = sand.u32 %s97, 1
        %s202 = smul.addr %s201, 64
        %s203 = scalar_lea.vmem [#allocation7], %s202
        %v204 = vld [vmem:[%s177] sm:$0xff]
        %v205 = vld [vmem:[%s177 + $0x8] sm:$0xff]
        %v206 = vld [vmem:[%s177 + $0x10] sm:$0xff]
        %v207 = vld [vmem:[%s177 + $0x18] sm:$0xff]
        %v208 = vld [vmem:[%s177 + $0x20] sm:$0xff]
        %v209 = vld [vmem:[%s177 + $0x28] sm:$0xff]
        %v210 = vld [vmem:[%s177 + $0x30] sm:$0xff]
        %v211 = vld [vmem:[%s177 + $0x38] sm:$0xff]
        %v212 = vld [vmem:[#allocation5] sm:$0xff]
        %v213 = vld [vmem:[#allocation5 + $0x8] sm:$0xff]
        %v214 = vld [vmem:[#allocation5 + $0x10] sm:$0xff]
        %v215 = vld [vmem:[#allocation5 + $0x18] sm:$0xff]
        %s216 = scalar_lea.vmem [#allocation5], 32
        %v217 = vld [vmem:[%s216] sm:$0xff]
        %v218 = vld [vmem:[%s216 + $0x8] sm:$0xff]
        %v219 = vld [vmem:[%s216 + $0x10] sm:$0xff]
        %v220 = vld [vmem:[%s216 + $0x18] sm:$0xff]
        %s221 = scalar_lea.vmem [#allocation5], 64
        %v222 = vld [vmem:[%s221] sm:$0xff]
        %v223 = vld [vmem:[%s221 + $0x8] sm:$0xff]
        %v224 = vld [vmem:[%s221 + $0x10] sm:$0xff]
        %v225 = vld [vmem:[%s221 + $0x18] sm:$0xff]
        %s226 = scalar_lea.vmem [#allocation5], 96
        %v227 = vld [vmem:[%s226] sm:$0xff]
        %v228 = vld [vmem:[%s226 + $0x8] sm:$0xff]
        %v229 = vld [vmem:[%s226 + $0x10] sm:$0xff]
        %v230 = vld [vmem:[%s226 + $0x18] sm:$0xff]
        %v231 = vld [vmem:[%s2] sm:$0xff]
        %v232 = vld [vmem:[%s2 + $0x8] sm:$0xff]
        %v233 = vld [vmem:[%s2 + $0x10] sm:$0xff]
        %v234 = vld [vmem:[%s2 + $0x18] sm:$0xff]
        %236 = vset.pattern.permute.xlu0 0
        %237 = vperm.xlu0 %236, %v231
        %v238 = vpop.permute.xlu0 %237
        %241 = vset.pattern.permute.xlu0 0
        %242 = vperm.xlu0 %241, %v232
        %v243 = vpop.permute.xlu0 %242
        %246 = vset.pattern.permute.xlu0 0
        %247 = vperm.xlu0 %246, %v233
        %v248 = vpop.permute.xlu0 %247
        %251 = vset.pattern.permute.xlu0 0
        %252 = vperm.xlu0 %251, %v234
        %v253 = vpop.permute.xlu0 %252
        %vm255 = vcmask 261120
        %v257 = vsel %vm255, %v212, 0
        %v260 = vsel %vm255, %v213, 0
        %v263 = vsel %vm255, %v214, 0
        %v266 = vsel %vm255, %v215, 0
        %268 = vmatprep.subr.mxu0 0.0
        %269 = vmatpush1.msra.mxu0 0.0
        %270 = vmatprep.subr.mxu0 0.0
        %271 = vmatpush1.msra.mxu0 0.0
        %272 = vmatprep.subr.mxu0 0.0
        %273 = vmatpush1.msra.mxu0 0.0
        %274 = vmatprep.subr.mxu0 0.0
        %275 = vmatpush1.msra.mxu0 0.0
        %276 = vmatprep.subr.mxu0 0.0
        %277 = vmatpush1.msra.mxu0 0.0
        %278 = vmatprep.subr.mxu0 0.0
        %279 = vmatpush1.msra.mxu0 0.0
        %280 = vmatprep.subr.mxu0 0.0
        %281 = vmatpush1.msra.mxu0 0.0
        %282 = vmatprep.subr.mxu0 0.0
        %283 = vmatpush1.msra.mxu0 0.0
        %284 = vmatprep.subr.mxu0 0.0
        %285 = vmatpush1.msra.mxu0 0.0
        %286 = vmatprep.subr.mxu0 0.0
        %287 = vmatpush1.msra.mxu0 0.0
        %288 = vmatprep.subr.mxu0 0.0
        %289 = vmatpush1.msra.mxu0 0.0
        %290 = vmatprep.subr.mxu0 0.0
        %291 = vmatpush1.msra.mxu0 0.0
        %292 = vmatprep.subr.mxu0 %v211
        %293 = vmatpush1.msra.mxu0 %v210
        %294 = vmatprep.subr.mxu0 %v209
        %295 = vmatpush1.msra.mxu0 %v208
        %296 = vmatprep.subr.mxu0 %v207
        %297 = vmatpush1.msra.mxu0 %v206
        %298 = vmatprep.subr.mxu0 %v205
        %299 = vmatpush1.msra.mxu0 %v204
        %300 = vmatprep.subr.mxu0 0.0
        %301 = vmatpush2.msra.mxu0 0.0
        %302 = vmatprep.subr.mxu0 0.0
        %303 = vmatpush2.msra.mxu0 0.0
        %304 = vmatprep.subr.mxu0 0.0
        %305 = vmatpush2.msra.mxu0 0.0
        %306 = vmatprep.subr.mxu0 0.0
        %307 = vmatpush2.msra.mxu0 0.0
        %308 = vmatprep.subr.mxu0 0.0
        %309 = vmatpush2.msra.mxu0 0.0
        %310 = vmatprep.subr.mxu0 0.0
        %311 = vmatpush2.msra.mxu0 0.0
        %312 = vmatprep.subr.mxu0 0.0
        %313 = vmatpush2.msra.mxu0 0.0
        %314 = vmatprep.subr.mxu0 0.0
        %315 = vmatpush2.msra.mxu0 0.0
        %316 = vmatprep.subr.mxu0 0.0
        %317 = vmatpush2.msra.mxu0 0.0
        %318 = vmatprep.subr.mxu0 0.0
        %319 = vmatpush2.msra.mxu0 0.0
        %320 = vmatprep.subr.mxu0 0.0
        %321 = vmatpush2.msra.mxu0 0.0
        %322 = vmatprep.subr.mxu0 0.0
        %323 = vmatpush2.msra.mxu0 0.0
        %324 = vmatprep.subr.mxu0 0.0
        %325 = vmatpush2.msra.mxu0 0.0
        %326 = vmatprep.subr.mxu0 0.0
        %327 = vmatpush2.msra.mxu0 0.0
        %328 = vmatprep.subr.mxu0 0.0
        %329 = vmatpush2.msra.mxu0 0.0
        %330 = vmatprep.subr.mxu0 0.0
        %331 = vmatpush2.msra.mxu0 0.0
        %332 = vmatprep.mubr.f32.mxu0 0.0
        %333 = vmatmul.mubr.f32.gmra.mxu0 %v257
        %v334 = vpop.f32.mrf.mxu0
        %v335 = vadd.f32 %v238, %v334
        %v336 = vpop.f32.mrf.mxu0
        %v337 = vadd.f32 %v238, %v336
        %338 = vmatprep.mubr.f32.mxu0 0.0
        %339 = vmatmul.mubr.f32.gmra.mxu0 %v260
        %v340 = vpop.f32.mrf.mxu0
        %v341 = vadd.f32 %v243, %v340
        %v342 = vpop.f32.mrf.mxu0
        %v343 = vadd.f32 %v243, %v342
        %344 = vmatprep.mubr.f32.mxu0 0.0
        %345 = vmatmul.mubr.f32.gmra.mxu0 %v263
        %v346 = vpop.f32.mrf.mxu0
        %v347 = vadd.f32 %v248, %v346
        %v348 = vpop.f32.mrf.mxu0
        %v349 = vadd.f32 %v248, %v348
        %350 = vmatprep.mubr.f32.mxu0 0.0
        %351 = vmatmul.mubr.f32.gmra.mxu0 %v266
        %v352 = vpop.f32.mrf.mxu0
        %v353 = vadd.f32 %v253, %v352
        %v354 = vpop.f32.mrf.mxu0
        %v355 = vadd.f32 %v253, %v354
        %356 = vdwg.mxu0
        %v357 = vlaneseq
        %v358 = vshrl.u32 %v357, 7
        %v359 = vadd.s32 %v358, 8
        %v360 = vmul.u32 %v358, 16
        %v361 = vmul.u32 %v359, 16
        %v362 = vlaneseq
        %v363 = vand.u32 %v362, 127
        %v364 = vadd.s32 %v363, 128
        %vm365 = vcmp.ge.s32.totalorder %v363, %v360
        %vm366 = vcmp.ge.s32.totalorder %v364, %v360
        %vm367 = vcmp.ge.s32.totalorder %v363, %v361
        %vm368 = vcmp.ge.s32.totalorder %v364, %v361
        %v369 = vadd.s32 %v360, 16
        %v370 = vadd.s32 %v361, 16
        %vm371 = vcmp.lt.s32.totalorder %v363, %v369
        %vm372 = vcmp.lt.s32.totalorder %v364, %v369
        %vm373 = vcmp.lt.s32.totalorder %v363, %v370
        %vm374 = vcmp.lt.s32.totalorder %v364, %v370
        %vm375 = vmand %vm365, %vm371
        %vm376 = vmand %vm366, %vm372
        %vm377 = vmand %vm367, %vm373
        %vm378 = vmand %vm368, %vm374
        %v379 = vsel %vm375, 1.0, 0.0
        %v380 = vsel %vm376, 1.0, 0.0
        %v381 = vsel %vm377, 1.0, 0.0
        %v382 = vsel %vm378, 1.0, 0.0
        %383 = vmatprep.subr.mxu0 0.0
        %384 = vmatpush1.xpose.msra.mxu0 0.0
        %385 = vmatprep.subr.mxu0 0.0
        %386 = vmatpush1.xpose.msra.mxu0 0.0
        %387 = vmatprep.subr.mxu0 0.0
        %388 = vmatpush1.xpose.msra.mxu0 0.0
        %389 = vmatprep.subr.mxu0 0.0
        %390 = vmatpush1.xpose.msra.mxu0 0.0
        %391 = vmatprep.subr.mxu0 0.0
        %392 = vmatpush1.xpose.msra.mxu0 0.0
        %393 = vmatprep.subr.mxu0 0.0
        %394 = vmatpush1.xpose.msra.mxu0 0.0
        %395 = vmatprep.subr.mxu0 0.0
        %396 = vmatpush1.xpose.msra.mxu0 0.0
        %397 = vmatprep.subr.mxu0 0.0
        %398 = vmatpush1.xpose.msra.mxu0 0.0
        %399 = vmatprep.subr.mxu0 0.0
        %400 = vmatpush1.xpose.msra.mxu0 0.0
        %401 = vmatprep.subr.mxu0 0.0
        %402 = vmatpush1.xpose.msra.mxu0 0.0
        %403 = vmatprep.subr.mxu0 0.0
        %404 = vmatpush1.xpose.msra.mxu0 0.0
        %405 = vmatprep.subr.mxu0 0.0
        %406 = vmatpush1.xpose.msra.mxu0 0.0
        %407 = vmatprep.subr.mxu0 0.0
        %408 = vmatpush1.xpose.msra.mxu0 0.0
        %409 = vmatprep.subr.mxu0 0.0
        %410 = vmatpush1.xpose.msra.mxu0 0.0
        %411 = vmatprep.subr.mxu0 %v382
        %412 = vmatpush1.xpose.msra.mxu0 %v381
        %413 = vmatprep.subr.mxu0 %v380
        %414 = vmatpush1.xpose.msra.mxu0 %v379
        %415 = vmatprep.subr.mxu0 0.0
        %416 = vmatpush2.xpose.msra.mxu0 0.0
        %417 = vmatprep.subr.mxu0 0.0
        %418 = vmatpush2.xpose.msra.mxu0 0.0
        %419 = vmatprep.subr.mxu0 0.0
        %420 = vmatpush2.xpose.msra.mxu0 0.0
        %421 = vmatprep.subr.mxu0 0.0
        %422 = vmatpush2.xpose.msra.mxu0 0.0
        %423 = vmatprep.subr.mxu0 0.0
        %424 = vmatpush2.xpose.msra.mxu0 0.0
        %425 = vmatprep.subr.mxu0 0.0
        %426 = vmatpush2.xpose.msra.mxu0 0.0
        %427 = vmatprep.subr.mxu0 0.0
        %428 = vmatpush2.xpose.msra.mxu0 0.0
        %429 = vmatprep.subr.mxu0 0.0
        %430 = vmatpush2.xpose.msra.mxu0 0.0
        %431 = vmatprep.subr.mxu0 0.0
        %432 = vmatpush2.xpose.msra.mxu0 0.0
        %433 = vmatprep.subr.mxu0 0.0
        %434 = vmatpush2.xpose.msra.mxu0 0.0
        %435 = vmatprep.subr.mxu0 0.0
        %436 = vmatpush2.xpose.msra.mxu0 0.0
        %437 = vmatprep.subr.mxu0 0.0
        %438 = vmatpush2.xpose.msra.mxu0 0.0
        %439 = vmatprep.subr.mxu0 0.0
        %440 = vmatpush2.xpose.msra.mxu0 0.0
        %441 = vmatprep.subr.mxu0 0.0
        %442 = vmatpush2.xpose.msra.mxu0 0.0
        %443 = vmatprep.subr.mxu0 0.0
        %444 = vmatpush2.xpose.msra.mxu0 0.0
        %445 = vmatprep.subr.mxu0 0.0
        %446 = vmatpush2.xpose.msra.mxu0 0.0
        %447 = vmatprep.mubr.f32.mxu0 %v337
        %448 = vmatmul.mubr.f32.gmra.mxu0 %v335
        %v449 = vpop.f32.mrf.mxu0
        %v450 = vadd.f32 0.0, %v449
        %v451 = vpop.f32.mrf.mxu0
        %452 = vmatprep.mubr.f32.mxu0 %v343
        %453 = vmatmul.mubr.f32.gmra.mxu0 %v341
        %v454 = vpop.f32.mrf.mxu0
        %v455 = vadd.f32 0.0, %v454
        %v456 = vpop.f32.mrf.mxu0
        %457 = vmatprep.mubr.f32.mxu0 %v349
        %458 = vmatmul.mubr.f32.gmra.mxu0 %v347
        %v459 = vpop.f32.mrf.mxu0
        %v460 = vadd.f32 0.0, %v459
        %v461 = vpop.f32.mrf.mxu0
        %462 = vmatprep.mubr.f32.mxu0 %v355
        %463 = vmatmul.mubr.f32.gmra.mxu0 %v353
        %v464 = vpop.f32.mrf.mxu0
        %v465 = vadd.f32 0.0, %v464
        %v466 = vpop.f32.mrf.mxu0
        %467 = vdwg.mxu0
        %v468 = vmul.f32 %v450, 0.0625
        %v469 = vmul.f32 %v455, 0.0625
        %v470 = vmul.f32 %v460, 0.0625
        %v471 = vmul.f32 %v465, 0.0625
        %v472 = vmul.f32 %v468, 0.5
        %v473 = vmul.f32 %v469, 0.5
        %v474 = vmul.f32 %v470, 0.5
        %v475 = vmul.f32 %v471, 0.5
        %v476 = vmul.f32 %v468, 0.044715
        %v477 = vmul.f32 %v469, 0.044715
        %v478 = vmul.f32 %v470, 0.044715
        %v479 = vmul.f32 %v471, 0.044715
        %v480 = vmul.f32 %v476, %v468
        %v481 = vmul.f32 %v477, %v469
        %v482 = vmul.f32 %v478, %v470
        %v483 = vmul.f32 %v479, %v471
        %v484 = vmul.f32 %v480, %v468
        %v485 = vmul.f32 %v481, %v469
        %v486 = vmul.f32 %v482, %v470
        %v487 = vmul.f32 %v483, %v471
        %v488 = vadd.f32 %v468, %v484
        %v489 = vadd.f32 %v469, %v485
        %v490 = vadd.f32 %v470, %v486
        %v491 = vadd.f32 %v471, %v487
        %v492 = vmul.f32 %v488, 0.7978846
        %v493 = vmul.f32 %v489, 0.7978846
        %v494 = vmul.f32 %v490, 0.7978846
        %v495 = vmul.f32 %v491, 0.7978846
        %v496 = vtanh.pop %v492
        %v497 = vtanh.pop %v493
        %v498 = vtanh.pop %v494
        %v499 = vtanh.pop %v495
        %v500 = vadd.f32 %v496, 1.0
        %v501 = vadd.f32 %v497, 1.0
        %v502 = vadd.f32 %v498, 1.0
        %v503 = vadd.f32 %v499, 1.0
        %v504 = vmul.f32 %v472, %v500
        %v505 = vmul.f32 %v473, %v501
        %v506 = vmul.f32 %v474, %v502
        %v507 = vmul.f32 %v475, %v503
        %508 = vset.pattern.permute.xlu0 1
        %509 = vperm.xlu0 %508, %v231
        %v510 = vpop.permute.xlu0 %509
        %512 = vset.pattern.permute.xlu0 1
        %513 = vperm.xlu0 %512, %v232
        %v514 = vpop.permute.xlu0 %513
        %516 = vset.pattern.permute.xlu0 1
        %517 = vperm.xlu0 %516, %v233
        %v518 = vpop.permute.xlu0 %517
        %520 = vset.pattern.permute.xlu0 1
        %521 = vperm.xlu0 %520, %v234
        %v522 = vpop.permute.xlu0 %521
        %v525 = vsel %vm255, %v217, 0
        %v528 = vsel %vm255, %v218, 0
        %v531 = vsel %vm255, %v219, 0
        %v534 = vsel %vm255, %v220, 0
        %536 = vmatprep.subr.mxu0 0.0
        %537 = vmatpush1.msra.mxu0 0.0
        %538 = vmatprep.subr.mxu0 0.0
        %539 = vmatpush1.msra.mxu0 0.0
        %540 = vmatprep.subr.mxu0 0.0
        %541 = vmatpush1.msra.mxu0 0.0
        %542 = vmatprep.subr.mxu0 0.0
        %543 = vmatpush1.msra.mxu0 0.0
        %544 = vmatprep.subr.mxu0 0.0
        %545 = vmatpush1.msra.mxu0 0.0
        %546 = vmatprep.subr.mxu0 0.0
        %547 = vmatpush1.msra.mxu0 0.0
        %548 = vmatprep.subr.mxu0 0.0
        %549 = vmatpush1.msra.mxu0 0.0
        %550 = vmatprep.subr.mxu0 0.0
        %551 = vmatpush1.msra.mxu0 0.0
        %552 = vmatprep.subr.mxu0 0.0
        %553 = vmatpush1.msra.mxu0 0.0
        %554 = vmatprep.subr.mxu0 0.0
        %555 = vmatpush1.msra.mxu0 0.0
        %556 = vmatprep.subr.mxu0 0.0
        %557 = vmatpush1.msra.mxu0 0.0
        %558 = vmatprep.subr.mxu0 0.0
        %559 = vmatpush1.msra.mxu0 0.0
        %560 = vmatprep.subr.mxu0 0.0
        %561 = vmatpush1.msra.mxu0 %v507
        %562 = vmatprep.subr.mxu0 0.0
        %563 = vmatpush1.msra.mxu0 %v506
        %564 = vmatprep.subr.mxu0 0.0
        %565 = vmatpush1.msra.mxu0 %v505
        %566 = vmatprep.subr.mxu0 0.0
        %567 = vmatpush1.msra.mxu0 %v504
        %568 = vmatprep.subr.mxu0 0.0
        %569 = vmatpush2.msra.mxu0 0.0
        %570 = vmatprep.subr.mxu0 0.0
        %571 = vmatpush2.msra.mxu0 0.0
        %572 = vmatprep.subr.mxu0 0.0
        %573 = vmatpush2.msra.mxu0 0.0
        %574 = vmatprep.subr.mxu0 0.0
        %575 = vmatpush2.msra.mxu0 0.0
        %576 = vmatprep.subr.mxu0 0.0
        %577 = vmatpush2.msra.mxu0 0.0
        %578 = vmatprep.subr.mxu0 0.0
        %579 = vmatpush2.msra.mxu0 0.0
        %580 = vmatprep.subr.mxu0 0.0
        %581 = vmatpush2.msra.mxu0 0.0
        %582 = vmatprep.subr.mxu0 0.0
        %583 = vmatpush2.msra.mxu0 0.0
        %584 = vmatprep.subr.mxu0 0.0
        %585 = vmatpush2.msra.mxu0 0.0
        %586 = vmatprep.subr.mxu0 0.0
        %587 = vmatpush2.msra.mxu0 0.0
        %588 = vmatprep.subr.mxu0 0.0
        %589 = vmatpush2.msra.mxu0 0.0
        %590 = vmatprep.subr.mxu0 0.0
        %591 = vmatpush2.msra.mxu0 0.0
        %592 = vmatprep.subr.mxu0 0.0
        %593 = vmatpush2.msra.mxu0 0.0
        %594 = vmatprep.subr.mxu0 0.0
        %595 = vmatpush2.msra.mxu0 0.0
        %596 = vmatprep.subr.mxu0 0.0
        %597 = vmatpush2.msra.mxu0 0.0
        %598 = vmatprep.subr.mxu0 0.0
        %599 = vmatpush2.msra.mxu0 0.0
        %600 = vmatprep.mubr.f32.mxu0 0.0
        %601 = vmatmul.mubr.f32.gmra.mxu0 %v525
        %v602 = vpop.f32.mrf.mxu0
        %v603 = vadd.f32 %v510, %v602
        %v604 = vpop.f32.mrf.mxu0
        %605 = vmatprep.mubr.f32.mxu0 0.0
        %606 = vmatmul.mubr.f32.gmra.mxu0 %v528
        %v607 = vpop.f32.mrf.mxu0
        %v608 = vadd.f32 %v514, %v607
        %v609 = vpop.f32.mrf.mxu0
        %610 = vmatprep.mubr.f32.mxu0 0.0
        %611 = vmatmul.mubr.f32.gmra.mxu0 %v531
        %v612 = vpop.f32.mrf.mxu0
        %v613 = vadd.f32 %v518, %v612
        %v614 = vpop.f32.mrf.mxu0
        %615 = vmatprep.mubr.f32.mxu0 0.0
        %616 = vmatmul.mubr.f32.gmra.mxu0 %v534
        %v617 = vpop.f32.mrf.mxu0
        %v618 = vadd.f32 %v522, %v617
        %v619 = vpop.f32.mrf.mxu0
        %620 = vdwg.mxu0
        %v621 = vmul.f32 %v603, 0.5
        %v622 = vmul.f32 %v608, 0.5
        %v623 = vmul.f32 %v613, 0.5
        %v624 = vmul.f32 %v618, 0.5
        %v625 = vmul.f32 %v603, 0.044715
        %v626 = vmul.f32 %v608, 0.044715
        %v627 = vmul.f32 %v613, 0.044715
        %v628 = vmul.f32 %v618, 0.044715
        %v629 = vmul.f32 %v625, %v603
        %v630 = vmul.f32 %v626, %v608
        %v631 = vmul.f32 %v627, %v613
        %v632 = vmul.f32 %v628, %v618
        %v633 = vmul.f32 %v629, %v603
        %v634 = vmul.f32 %v630, %v608
        %v635 = vmul.f32 %v631, %v613
        %v636 = vmul.f32 %v632, %v618
        %v637 = vadd.f32 %v603, %v633
        %v638 = vadd.f32 %v608, %v634
        %v639 = vadd.f32 %v613, %v635
        %v640 = vadd.f32 %v618, %v636
        %v641 = vmul.f32 %v637, 0.7978846
        %v642 = vmul.f32 %v638, 0.7978846
        %v643 = vmul.f32 %v639, 0.7978846
        %v644 = vmul.f32 %v640, 0.7978846
        %v645 = vtanh.pop %v641
        %v646 = vtanh.pop %v642
        %v647 = vtanh.pop %v643
        %v648 = vtanh.pop %v644
        %v649 = vadd.f32 %v645, 1.0
        %v650 = vadd.f32 %v646, 1.0
        %v651 = vadd.f32 %v647, 1.0
        %v652 = vadd.f32 %v648, 1.0
        %v653 = vmul.f32 %v621, %v649
        %v654 = vmul.f32 %v622, %v650
        %v655 = vmul.f32 %v623, %v651
        %v656 = vmul.f32 %v624, %v652
        %657 = vmatprep.subr.mxu0 0.0
        %658 = vmatpush1.msra.mxu0 0.0
        %659 = vmatprep.subr.mxu0 0.0
        %660 = vmatpush1.msra.mxu0 0.0
        %661 = vmatprep.subr.mxu0 0.0
        %662 = vmatpush1.msra.mxu0 0.0
        %663 = vmatprep.subr.mxu0 0.0
        %664 = vmatpush1.msra.mxu0 0.0
        %665 = vmatprep.subr.mxu0 0.0
        %666 = vmatpush1.msra.mxu0 0.0
        %667 = vmatprep.subr.mxu0 0.0
        %668 = vmatpush1.msra.mxu0 0.0
        %669 = vmatprep.subr.mxu0 0.0
        %670 = vmatpush1.msra.mxu0 0.0
        %671 = vmatprep.subr.mxu0 0.0
        %672 = vmatpush1.msra.mxu0 0.0
        %673 = vmatprep.subr.mxu0 0.0
        %674 = vmatpush1.msra.mxu0 0.0
        %675 = vmatprep.subr.mxu0 0.0
        %676 = vmatpush1.msra.mxu0 0.0
        %677 = vmatprep.subr.mxu0 0.0
        %678 = vmatpush1.msra.mxu0 0.0
        %679 = vmatprep.subr.mxu0 0.0
        %680 = vmatpush1.msra.mxu0 0.0
        %681 = vmatprep.subr.mxu0 0.0
        %682 = vmatpush1.msra.mxu0 %v656
        %683 = vmatprep.subr.mxu0 0.0
        %684 = vmatpush1.msra.mxu0 %v655
        %685 = vmatprep.subr.mxu0 0.0
        %686 = vmatpush1.msra.mxu0 %v654
        %687 = vmatprep.subr.mxu0 0.0
        %688 = vmatpush1.msra.mxu0 %v653
        %689 = vmatprep.subr.mxu0 0.0
        %690 = vmatpush2.msra.mxu0 0.0
        %691 = vmatprep.subr.mxu0 0.0
        %692 = vmatpush2.msra.mxu0 0.0
        %693 = vmatprep.subr.mxu0 0.0
        %694 = vmatpush2.msra.mxu0 0.0
        %695 = vmatprep.subr.mxu0 0.0
        %696 = vmatpush2.msra.mxu0 0.0
        %697 = vmatprep.subr.mxu0 0.0
        %698 = vmatpush2.msra.mxu0 0.0
        %699 = vmatprep.subr.mxu0 0.0
        %700 = vmatpush2.msra.mxu0 0.0
        %701 = vmatprep.subr.mxu0 0.0
        %702 = vmatpush2.msra.mxu0 0.0
        %703 = vmatprep.subr.mxu0 0.0
        %704 = vmatpush2.msra.mxu0 0.0
        %705 = vmatprep.subr.mxu0 0.0
        %706 = vmatpush2.msra.mxu0 0.0
        %707 = vmatprep.subr.mxu0 0.0
        %708 = vmatpush2.msra.mxu0 0.0
        %709 = vmatprep.subr.mxu0 0.0
        %710 = vmatpush2.msra.mxu0 0.0
        %711 = vmatprep.subr.mxu0 0.0
        %712 = vmatpush2.msra.mxu0 0.0
        %713 = vmatprep.subr.mxu0 0.0
        %714 = vmatpush2.msra.mxu0 0.0
        %715 = vmatprep.subr.mxu0 0.0
        %716 = vmatpush2.msra.mxu0 0.0
        %717 = vmatprep.subr.mxu0 0.0
        %718 = vmatpush2.msra.mxu0 0.0
        %719 = vmatprep.subr.mxu0 0.0
        %720 = vmatpush2.msra.mxu0 0.0
        %721 = vmatprep.mubr.f32.mxu0 0.0
        %722 = vmatmul.mubr.f32.gmra.mxu0 %v257
        %v723 = vpop.f32.mrf.mxu0
        %v724 = vadd.f32 %v238, %v723
        %v725 = vpop.f32.mrf.mxu0
        %726 = vmatprep.mubr.f32.mxu0 0.0
        %727 = vmatmul.mubr.f32.gmra.mxu0 %v260
        %v728 = vpop.f32.mrf.mxu0
        %v729 = vadd.f32 %v243, %v728
        %v730 = vpop.f32.mrf.mxu0
        %731 = vmatprep.mubr.f32.mxu0 0.0
        %732 = vmatmul.mubr.f32.gmra.mxu0 %v263
        %v733 = vpop.f32.mrf.mxu0
        %v734 = vadd.f32 %v248, %v733
        %v735 = vpop.f32.mrf.mxu0
        %736 = vmatprep.mubr.f32.mxu0 0.0
        %737 = vmatmul.mubr.f32.gmra.mxu0 %v266
        %v738 = vpop.f32.mrf.mxu0
        %v739 = vadd.f32 %v253, %v738
        %v740 = vpop.f32.mrf.mxu0
        %741 = vdwg.mxu0
        %v742 = vxor.u32 %v724, 2147483648
        %v743 = vxor.u32 %v729, 2147483648
        %v744 = vxor.u32 %v734, 2147483648
        %v745 = vxor.u32 %v739, 2147483648
        %v746 = vmul.f32 %v742, 1.442695
        %v747 = vpow.pop %v746
        %v748 = vmul.f32 %v743, 1.442695
        %v749 = vpow.pop %v748
        %v750 = vmul.f32 %v744, 1.442695
        %v751 = vpow.pop %v750
        %v752 = vmul.f32 %v745, 1.442695
        %v753 = vpow.pop %v752
        %v754 = vadd.f32 %v747, 1.0
        %v755 = vadd.f32 %v749, 1.0
        %v756 = vadd.f32 %v751, 1.0
        %v757 = vadd.f32 %v753, 1.0
        %v758 = vrcp.pop %v754
        %v759 = vmul.f32 1.0, %v758
        %v760 = vrcp.pop %v755
        %v761 = vmul.f32 1.0, %v760
        %v762 = vrcp.pop %v756
        %v763 = vmul.f32 1.0, %v762
        %v764 = vrcp.pop %v757
        %v765 = vmul.f32 1.0, %v764
        %vm766 = vcmask 130048
        %v767 = vsel %vm766, %v653, 0.0
        %v768 = vsel %vm766, %v654, 0.0
        %v769 = vadd.f32 %v767, %v768
        %v770 = vsel %vm766, %v655, 0.0
        %v771 = vadd.f32 %v769, %v770
        %v772 = vsel %vm766, %v656, 0.0
        %v773 = vadd.f32 %v771, %v772
        %v774 = vrot.slane %v773, 4
        %v775 = vadd.f32 %v773, %v774
        %v776 = vrot.slane %v775, 2
        %v777 = vadd.f32 %v775, %v776
        %v778 = vrot.slane %v777, 1
        %v779 = vadd.f32 %v777, %v778
        %v780 = vxor.u32 %v779, 2147483648
        %v781 = vmul.f32 %v780, 1.442695
        %v782 = vpow.pop %v781
        %v783 = vadd.f32 %v782, 1.0
        %v784 = vrcp.pop %v783
        %v785 = vmul.f32 1.0, %v784
        %v786 = vmul.f32 %v759, %v785
        %v787 = vmul.f32 %v761, %v785
        %v788 = vmul.f32 %v763, %v785
        %v789 = vmul.f32 %v765, %v785
        %v791 = vsel %vm766, %v786, 0
        %v794 = vsel %vm766, %v787, 0
        %v797 = vsel %vm766, %v788, 0
        %v800 = vsel %vm766, %v789, 0
        %802 = vmatprep.subr.mxu0 0.0
        %803 = vmatpush1.msra.mxu0 0.0
        %804 = vmatprep.subr.mxu0 0.0
        %805 = vmatpush1.msra.mxu0 0.0
        %806 = vmatprep.subr.mxu0 0.0
        %807 = vmatpush1.msra.mxu0 0.0
        %808 = vmatprep.subr.mxu0 0.0
        %809 = vmatpush1.msra.mxu0 0.0
        %810 = vmatprep.subr.mxu0 0.0
        %811 = vmatpush1.msra.mxu0 0.0
        %812 = vmatprep.subr.mxu0 0.0
        %813 = vmatpush1.msra.mxu0 0.0
        %814 = vmatprep.subr.mxu0 0.0
        %815 = vmatpush1.msra.mxu0 0.0
        %816 = vmatprep.subr.mxu0 0.0
        %817 = vmatpush1.msra.mxu0 0.0
        %818 = vmatprep.subr.mxu0 0.0
        %819 = vmatpush1.msra.mxu0 0.0
        %820 = vmatprep.subr.mxu0 0.0
        %821 = vmatpush1.msra.mxu0 0.0
        %822 = vmatprep.subr.mxu0 0.0
        %823 = vmatpush1.msra.mxu0 0.0
        %824 = vmatprep.subr.mxu0 0.0
        %825 = vmatpush1.msra.mxu0 0.0
        %826 = vmatprep.subr.mxu0 0.0
        %827 = vmatpush1.msra.mxu0 0.0
        %828 = vmatprep.subr.mxu0 0.0
        %829 = vmatpush1.msra.mxu0 0.0
        %830 = vmatprep.subr.mxu0 %v382
        %831 = vmatpush1.msra.mxu0 %v381
        %832 = vmatprep.subr.mxu0 %v380
        %833 = vmatpush1.msra.mxu0 %v379
        %834 = vmatprep.subr.mxu0 0.0
        %835 = vmatpush2.msra.mxu0 0.0
        %836 = vmatprep.subr.mxu0 0.0
        %837 = vmatpush2.msra.mxu0 0.0
        %838 = vmatprep.subr.mxu0 0.0
        %839 = vmatpush2.msra.mxu0 0.0
        %840 = vmatprep.subr.mxu0 0.0
        %841 = vmatpush2.msra.mxu0 0.0
        %842 = vmatprep.subr.mxu0 0.0
        %843 = vmatpush2.msra.mxu0 0.0
        %844 = vmatprep.subr.mxu0 0.0
        %845 = vmatpush2.msra.mxu0 0.0
        %846 = vmatprep.subr.mxu0 0.0
        %847 = vmatpush2.msra.mxu0 0.0
        %848 = vmatprep.subr.mxu0 0.0
        %849 = vmatpush2.msra.mxu0 0.0
        %850 = vmatprep.subr.mxu0 0.0
        %851 = vmatpush2.msra.mxu0 0.0
        %852 = vmatprep.subr.mxu0 0.0
        %853 = vmatpush2.msra.mxu0 0.0
        %854 = vmatprep.subr.mxu0 0.0
        %855 = vmatpush2.msra.mxu0 0.0
        %856 = vmatprep.subr.mxu0 0.0
        %857 = vmatpush2.msra.mxu0 0.0
        %858 = vmatprep.subr.mxu0 0.0
        %859 = vmatpush2.msra.mxu0 0.0
        %860 = vmatprep.subr.mxu0 0.0
        %861 = vmatpush2.msra.mxu0 0.0
        %862 = vmatprep.subr.mxu0 0.0
        %863 = vmatpush2.msra.mxu0 0.0
        %864 = vmatprep.subr.mxu0 0.0
        %865 = vmatpush2.msra.mxu0 0.0
        %866 = vmatprep.mubr.f32.mxu0 0.0
        %867 = vmatmul.mubr.f32.gmra.mxu0 %v791
        %v868 = vpop.f32.mrf.mxu0
        %v869 = vadd.f32 0.0, %v868
        %v870 = vpop.f32.mrf.mxu0
        %v871 = vadd.f32 0.0, %v870
        %872 = vmatprep.mubr.f32.mxu0 0.0
        %873 = vmatmul.mubr.f32.gmra.mxu0 %v794
        %v874 = vpop.f32.mrf.mxu0
        %v875 = vadd.f32 0.0, %v874
        %v876 = vpop.f32.mrf.mxu0
        %v877 = vadd.f32 0.0, %v876
        %878 = vmatprep.mubr.f32.mxu0 0.0
        %879 = vmatmul.mubr.f32.gmra.mxu0 %v797
        %v880 = vpop.f32.mrf.mxu0
        %v881 = vadd.f32 0.0, %v880
        %v882 = vpop.f32.mrf.mxu0
        %v883 = vadd.f32 0.0, %v882
        %884 = vmatprep.mubr.f32.mxu0 0.0
        %885 = vmatmul.mubr.f32.gmra.mxu0 %v800
        %v886 = vpop.f32.mrf.mxu0
        %v887 = vadd.f32 0.0, %v886
        %v888 = vpop.f32.mrf.mxu0
        %v889 = vadd.f32 0.0, %v888
        %890 = vdwg.mxu0
        %v891 = vmul.f32 %v204, %v869
        %v892 = vmul.f32 %v205, %v871
        %v893 = vmul.f32 %v206, %v875
        %v894 = vmul.f32 %v207, %v877
        %v895 = vmul.f32 %v208, %v881
        %v896 = vmul.f32 %v209, %v883
        %v897 = vmul.f32 %v210, %v887
        %v898 = vmul.f32 %v211, %v889
        %v900 = vsel %vm255, %v222, 0
        %v903 = vsel %vm255, %v223, 0
        %v906 = vsel %vm255, %v224, 0
        %v909 = vsel %vm255, %v225, 0
        %911 = vmatprep.subr.mxu0 0.0
        %912 = vmatpush1.msra.mxu0 0.0
        %913 = vmatprep.subr.mxu0 0.0
        %914 = vmatpush1.msra.mxu0 0.0
        %915 = vmatprep.subr.mxu0 0.0
        %916 = vmatpush1.msra.mxu0 0.0
        %917 = vmatprep.subr.mxu0 0.0
        %918 = vmatpush1.msra.mxu0 0.0
        %919 = vmatprep.subr.mxu0 0.0
        %920 = vmatpush1.msra.mxu0 0.0
        %921 = vmatprep.subr.mxu0 0.0
        %922 = vmatpush1.msra.mxu0 0.0
        %923 = vmatprep.subr.mxu0 0.0
        %924 = vmatpush1.msra.mxu0 0.0
        %925 = vmatprep.subr.mxu0 0.0
        %926 = vmatpush1.msra.mxu0 0.0
        %927 = vmatprep.subr.mxu0 0.0
        %928 = vmatpush1.msra.mxu0 0.0
        %929 = vmatprep.subr.mxu0 0.0
        %930 = vmatpush1.msra.mxu0 0.0
        %931 = vmatprep.subr.mxu0 0.0
        %932 = vmatpush1.msra.mxu0 0.0
        %933 = vmatprep.subr.mxu0 0.0
        %934 = vmatpush1.msra.mxu0 0.0
        %935 = vmatprep.subr.mxu0 %v898
        %936 = vmatpush1.msra.mxu0 %v897
        %937 = vmatprep.subr.mxu0 %v896
        %938 = vmatpush1.msra.mxu0 %v895
        %939 = vmatprep.subr.mxu0 %v894
        %940 = vmatpush1.msra.mxu0 %v893
        %941 = vmatprep.subr.mxu0 %v892
        %942 = vmatpush1.msra.mxu0 %v891
        %943 = vmatprep.subr.mxu0 0.0
        %944 = vmatpush2.msra.mxu0 0.0
        %945 = vmatprep.subr.mxu0 0.0
        %946 = vmatpush2.msra.mxu0 0.0
        %947 = vmatprep.subr.mxu0 0.0
        %948 = vmatpush2.msra.mxu0 0.0
        %949 = vmatprep.subr.mxu0 0.0
        %950 = vmatpush2.msra.mxu0 0.0
        %951 = vmatprep.subr.mxu0 0.0
        %952 = vmatpush2.msra.mxu0 0.0
        %953 = vmatprep.subr.mxu0 0.0
        %954 = vmatpush2.msra.mxu0 0.0
        %955 = vmatprep.subr.mxu0 0.0
        %956 = vmatpush2.msra.mxu0 0.0
        %957 = vmatprep.subr.mxu0 0.0
        %958 = vmatpush2.msra.mxu0 0.0
        %959 = vmatprep.subr.mxu0 0.0
        %960 = vmatpush2.msra.mxu0 0.0
        %961 = vmatprep.subr.mxu0 0.0
        %962 = vmatpush2.msra.mxu0 0.0
        %963 = vmatprep.subr.mxu0 0.0
        %964 = vmatpush2.msra.mxu0 0.0
        %965 = vmatprep.subr.mxu0 0.0
        %966 = vmatpush2.msra.mxu0 0.0
        %967 = vmatprep.subr.mxu0 0.0
        %968 = vmatpush2.msra.mxu0 0.0
        %969 = vmatprep.subr.mxu0 0.0
        %970 = vmatpush2.msra.mxu0 0.0
        %971 = vmatprep.subr.mxu0 0.0
        %972 = vmatpush2.msra.mxu0 0.0
        %973 = vmatprep.subr.mxu0 0.0
        %974 = vmatpush2.msra.mxu0 0.0
        %975 = vmatprep.mubr.f32.mxu0 0.0
        %976 = vmatmul.mubr.f32.gmra.mxu0 %v900
        %v977 = vpop.f32.mrf.mxu0
        %v978 = vadd.f32 0.0, %v977
        %v979 = vpop.f32.mrf.mxu0
        %v980 = vadd.f32 0.0, %v979
        %981 = vmatprep.mubr.f32.mxu0 0.0
        %982 = vmatmul.mubr.f32.gmra.mxu0 %v903
        %v983 = vpop.f32.mrf.mxu0
        %v984 = vadd.f32 0.0, %v983
        %v985 = vpop.f32.mrf.mxu0
        %v986 = vadd.f32 0.0, %v985
        %987 = vmatprep.mubr.f32.mxu0 0.0
        %988 = vmatmul.mubr.f32.gmra.mxu0 %v906
        %v989 = vpop.f32.mrf.mxu0
        %v990 = vadd.f32 0.0, %v989
        %v991 = vpop.f32.mrf.mxu0
        %v992 = vadd.f32 0.0, %v991
        %993 = vmatprep.mubr.f32.mxu0 0.0
        %994 = vmatmul.mubr.f32.gmra.mxu0 %v909
        %v995 = vpop.f32.mrf.mxu0
        %v996 = vadd.f32 0.0, %v995
        %v997 = vpop.f32.mrf.mxu0
        %v998 = vadd.f32 0.0, %v997
        %999 = vdwg.mxu0
        %v1000 = vadd.f32 %v978, %v980
        %1001 = vadd.xlane.f32.xlu0 %v1000
        %v1002 = vpop.xlane.xlu0 %1001
        %v1003 = vadd.f32 %v984, %v986
        %1004 = vadd.xlane.f32.xlu0 %v1003
        %v1005 = vpop.xlane.xlu0 %1004
        %v1006 = vadd.f32 %v990, %v992
        %1007 = vadd.xlane.f32.xlu0 %v1006
        %v1008 = vpop.xlane.xlu0 %1007
        %v1009 = vadd.f32 %v996, %v998
        %1010 = vadd.xlane.f32.xlu0 %v1009
        %v1011 = vpop.xlane.xlu0 %1010
        %v1012 = vrcp.pop 256.0
        %v1013 = vmul.f32 %v1002, %v1012
        %v1014 = vmul.f32 %v1005, %v1012
        %v1015 = vmul.f32 %v1008, %v1012
        %v1016 = vmul.f32 %v1011, %v1012
        %v1017 = vsub.f32 %v978, %v1013
        %v1018 = vsub.f32 %v980, %v1013
        %v1019 = vsub.f32 %v984, %v1014
        %v1020 = vsub.f32 %v986, %v1014
        %v1021 = vsub.f32 %v990, %v1015
        %v1022 = vsub.f32 %v992, %v1015
        %v1023 = vsub.f32 %v996, %v1016
        %v1024 = vsub.f32 %v998, %v1016
        %v1025 = vmul.f32 %v1017, %v1017
        %v1026 = vmul.f32 %v1018, %v1018
        %v1027 = vmul.f32 %v1019, %v1019
        %v1028 = vmul.f32 %v1020, %v1020
        %v1029 = vmul.f32 %v1021, %v1021
        %v1030 = vmul.f32 %v1022, %v1022
        %v1031 = vmul.f32 %v1023, %v1023
        %v1032 = vmul.f32 %v1024, %v1024
        %v1033 = vadd.f32 %v1025, %v1026
        %1034 = vadd.xlane.f32.xlu0 %v1033
        %v1035 = vpop.xlane.xlu0 %1034
        %v1036 = vadd.f32 %v1027, %v1028
        %1037 = vadd.xlane.f32.xlu0 %v1036
        %v1038 = vpop.xlane.xlu0 %1037
        %v1039 = vadd.f32 %v1029, %v1030
        %1040 = vadd.xlane.f32.xlu0 %v1039
        %v1041 = vpop.xlane.xlu0 %1040
        %v1042 = vadd.f32 %v1031, %v1032
        %1043 = vadd.xlane.f32.xlu0 %v1042
        %v1044 = vpop.xlane.xlu0 %1043
        %v1045 = vmul.f32 %v1035, %v1012
        %v1046 = vmul.f32 %v1038, %v1012
        %v1047 = vmul.f32 %v1041, %v1012
        %v1048 = vmul.f32 %v1044, %v1012
        %v1049 = vadd.f32 %v1045, 1e-05
        %v1050 = vadd.f32 %v1046, 1e-05
        %v1051 = vadd.f32 %v1047, 1e-05
        %v1052 = vadd.f32 %v1048, 1e-05
        %v1053 = vrsqrt.pop %v1049
        %v1054 = vrsqrt.pop %v1050
        %v1055 = vrsqrt.pop %v1051
        %v1056 = vrsqrt.pop %v1052
        %v1057 = vmul.f32 %v1053, %v231
        %v1058 = vmul.f32 %v1054, %v232
        %v1059 = vmul.f32 %v1055, %v233
        %v1060 = vmul.f32 %v1056, %v234
        %1062 = vset.pattern.permute.xlu0 2
        %1063 = vperm.xlu0 %1062, %v1057
        %v1064 = vpop.permute.xlu0 %1063
        %1067 = vset.pattern.permute.xlu0 2
        %1068 = vperm.xlu0 %1067, %v1058
        %v1069 = vpop.permute.xlu0 %1068
        %1072 = vset.pattern.permute.xlu0 2
        %1073 = vperm.xlu0 %1072, %v1059
        %v1074 = vpop.permute.xlu0 %1073
        %1077 = vset.pattern.permute.xlu0 2
        %1078 = vperm.xlu0 %1077, %v1060
        %v1079 = vpop.permute.xlu0 %1078
        %v1081 = vmul.f32 %v978, %v1064
        %v1082 = vmul.f32 %v980, %v1064
        %v1083 = vmul.f32 %v984, %v1069
        %v1084 = vmul.f32 %v986, %v1069
        %v1085 = vmul.f32 %v990, %v1074
        %v1086 = vmul.f32 %v992, %v1074
        %v1087 = vmul.f32 %v996, %v1079
        %v1088 = vmul.f32 %v998, %v1079
        %v1089 = vmul.f32 %v1013, %v1057
        %v1090 = vmul.f32 %v1014, %v1058
        %v1091 = vmul.f32 %v1015, %v1059
        %v1092 = vmul.f32 %v1016, %v1060
        %1097 = vrot.lane.b32.xlu0 %v1089, 1
        %v1098 = vpop.permute.xlu0 %1097
        %1099 = vrot.lane.b32.xlu0 %v1090, 1
        %v1100 = vpop.permute.xlu0 %1099
        %1101 = vrot.lane.b32.xlu0 %v1091, 1
        %v1102 = vpop.permute.xlu0 %1101
        %1103 = vrot.lane.b32.xlu0 %v1092, 1
        %v1104 = vpop.permute.xlu0 %1103
        %v1109 = vsub.f32 %v231, %v1098
        %v1110 = vsub.f32 %v232, %v1100
        %v1111 = vsub.f32 %v233, %v1102
        %v1112 = vsub.f32 %v234, %v1104
        %1114 = vset.pattern.permute.xlu0 3
        %1115 = vperm.xlu0 %1114, %v1109
        %v1116 = vpop.permute.xlu0 %1115
        %1119 = vset.pattern.permute.xlu0 3
        %1120 = vperm.xlu0 %1119, %v1110
        %v1121 = vpop.permute.xlu0 %1120
        %1124 = vset.pattern.permute.xlu0 3
        %1125 = vperm.xlu0 %1124, %v1111
        %v1126 = vpop.permute.xlu0 %1125
        %1129 = vset.pattern.permute.xlu0 3
        %1130 = vperm.xlu0 %1129, %v1112
        %v1131 = vpop.permute.xlu0 %1130
        %v1133 = vadd.f32 %v1081, %v1116
        %v1134 = vadd.f32 %v1082, %v1116
        %v1135 = vadd.f32 %v1083, %v1121
        %v1136 = vadd.f32 %v1084, %v1121
        %v1137 = vadd.f32 %v1085, %v1126
        %v1138 = vadd.f32 %v1086, %v1126
        %v1139 = vadd.f32 %v1087, %v1131
        %v1140 = vadd.f32 %v1088, %v1131
        %v1141 = vmul.f32 %v1133, 0.5
        %v1142 = vmul.f32 %v1134, 0.5
        %v1143 = vmul.f32 %v1135, 0.5
        %v1144 = vmul.f32 %v1136, 0.5
        %v1145 = vmul.f32 %v1137, 0.5
        %v1146 = vmul.f32 %v1138, 0.5
        %v1147 = vmul.f32 %v1139, 0.5
        %v1148 = vmul.f32 %v1140, 0.5
        %v1149 = vmul.f32 %v1133, 0.044715
        %v1150 = vmul.f32 %v1134, 0.044715
        %v1151 = vmul.f32 %v1135, 0.044715
        %v1152 = vmul.f32 %v1136, 0.044715
        %v1153 = vmul.f32 %v1137, 0.044715
        %v1154 = vmul.f32 %v1138, 0.044715
        %v1155 = vmul.f32 %v1139, 0.044715
        %v1156 = vmul.f32 %v1140, 0.044715
        %v1157 = vmul.f32 %v1149, %v1133
        %v1158 = vmul.f32 %v1150, %v1134
        %v1159 = vmul.f32 %v1151, %v1135
        %v1160 = vmul.f32 %v1152, %v1136
        %v1161 = vmul.f32 %v1153, %v1137
        %v1162 = vmul.f32 %v1154, %v1138
        %v1163 = vmul.f32 %v1155, %v1139
        %v1164 = vmul.f32 %v1156, %v1140
        %v1165 = vmul.f32 %v1157, %v1133
        %v1166 = vmul.f32 %v1158, %v1134
        %v1167 = vmul.f32 %v1159, %v1135
        %v1168 = vmul.f32 %v1160, %v1136
        %v1169 = vmul.f32 %v1161, %v1137
        %v1170 = vmul.f32 %v1162, %v1138
        %v1171 = vmul.f32 %v1163, %v1139
        %v1172 = vmul.f32 %v1164, %v1140
        %v1173 = vadd.f32 %v1133, %v1165
        %v1174 = vadd.f32 %v1134, %v1166
        %v1175 = vadd.f32 %v1135, %v1167
        %v1176 = vadd.f32 %v1136, %v1168
        %v1177 = vadd.f32 %v1137, %v1169
        %v1178 = vadd.f32 %v1138, %v1170
        %v1179 = vadd.f32 %v1139, %v1171
        %v1180 = vadd.f32 %v1140, %v1172
        %v1181 = vmul.f32 %v1173, 0.7978846
        %v1182 = vmul.f32 %v1174, 0.7978846
        %v1183 = vmul.f32 %v1175, 0.7978846
        %v1184 = vmul.f32 %v1176, 0.7978846
        %v1185 = vmul.f32 %v1177, 0.7978846
        %v1186 = vmul.f32 %v1178, 0.7978846
        %v1187 = vmul.f32 %v1179, 0.7978846
        %v1188 = vmul.f32 %v1180, 0.7978846
        %v1189 = vtanh.pop %v1181
        %v1190 = vtanh.pop %v1182
        %v1191 = vtanh.pop %v1183
        %v1192 = vtanh.pop %v1184
        %v1193 = vtanh.pop %v1185
        %v1194 = vtanh.pop %v1186
        %v1195 = vtanh.pop %v1187
        %v1196 = vtanh.pop %v1188
        %v1197 = vadd.f32 %v1189, 1.0
        %v1198 = vadd.f32 %v1190, 1.0
        %v1199 = vadd.f32 %v1191, 1.0
        %v1200 = vadd.f32 %v1192, 1.0
        %v1201 = vadd.f32 %v1193, 1.0
        %v1202 = vadd.f32 %v1194, 1.0
        %v1203 = vadd.f32 %v1195, 1.0
        %v1204 = vadd.f32 %v1196, 1.0
        %v1205 = vmul.f32 %v1141, %v1197
        %v1206 = vmul.f32 %v1142, %v1198
        %v1207 = vmul.f32 %v1143, %v1199
        %v1208 = vmul.f32 %v1144, %v1200
        %v1209 = vmul.f32 %v1145, %v1201
        %v1210 = vmul.f32 %v1146, %v1202
        %v1211 = vmul.f32 %v1147, %v1203
        %v1212 = vmul.f32 %v1148, %v1204
        %v1214 = vsel %vm255, %v227, 0
        %v1217 = vsel %vm255, %v228, 0
        %v1220 = vsel %vm255, %v229, 0
        %v1223 = vsel %vm255, %v230, 0
        %1225 = vmatprep.subr.mxu0 0.0
        %1226 = vmatpush1.msra.mxu0 0.0
        %1227 = vmatprep.subr.mxu0 0.0
        %1228 = vmatpush1.msra.mxu0 0.0
        %1229 = vmatprep.subr.mxu0 0.0
        %1230 = vmatpush1.msra.mxu0 0.0
        %1231 = vmatprep.subr.mxu0 0.0
        %1232 = vmatpush1.msra.mxu0 0.0
        %1233 = vmatprep.subr.mxu0 0.0
        %1234 = vmatpush1.msra.mxu0 0.0
        %1235 = vmatprep.subr.mxu0 0.0
        %1236 = vmatpush1.msra.mxu0 0.0
        %1237 = vmatprep.subr.mxu0 0.0
        %1238 = vmatpush1.msra.mxu0 0.0
        %1239 = vmatprep.subr.mxu0 0.0
        %1240 = vmatpush1.msra.mxu0 0.0
        %1241 = vmatprep.subr.mxu0 0.0
        %1242 = vmatpush1.msra.mxu0 0.0
        %1243 = vmatprep.subr.mxu0 0.0
        %1244 = vmatpush1.msra.mxu0 0.0
        %1245 = vmatprep.subr.mxu0 0.0
        %1246 = vmatpush1.msra.mxu0 0.0
        %1247 = vmatprep.subr.mxu0 0.0
        %1248 = vmatpush1.msra.mxu0 0.0
        %1249 = vmatprep.subr.mxu0 %v1212
        %1250 = vmatpush1.msra.mxu0 %v1211
        %1251 = vmatprep.subr.mxu0 %v1210
        %1252 = vmatpush1.msra.mxu0 %v1209
        %1253 = vmatprep.subr.mxu0 %v1208
        %1254 = vmatpush1.msra.mxu0 %v1207
        %1255 = vmatprep.subr.mxu0 %v1206
        %1256 = vmatpush1.msra.mxu0 %v1205
        %1257 = vmatprep.subr.mxu0 0.0
        %1258 = vmatpush2.msra.mxu0 0.0
        %1259 = vmatprep.subr.mxu0 0.0
        %1260 = vmatpush2.msra.mxu0 0.0
        %1261 = vmatprep.subr.mxu0 0.0
        %1262 = vmatpush2.msra.mxu0 0.0
        %1263 = vmatprep.subr.mxu0 0.0
        %1264 = vmatpush2.msra.mxu0 0.0
        %1265 = vmatprep.subr.mxu0 0.0
        %1266 = vmatpush2.msra.mxu0 0.0
        %1267 = vmatprep.subr.mxu0 0.0
        %1268 = vmatpush2.msra.mxu0 0.0
        %1269 = vmatprep.subr.mxu0 0.0
        %1270 = vmatpush2.msra.mxu0 0.0
        %1271 = vmatprep.subr.mxu0 0.0
        %1272 = vmatpush2.msra.mxu0 0.0
        %1273 = vmatprep.subr.mxu0 0.0
        %1274 = vmatpush2.msra.mxu0 0.0
        %1275 = vmatprep.subr.mxu0 0.0
        %1276 = vmatpush2.msra.mxu0 0.0
        %1277 = vmatprep.subr.mxu0 0.0
        %1278 = vmatpush2.msra.mxu0 0.0
        %1279 = vmatprep.subr.mxu0 0.0
        %1280 = vmatpush2.msra.mxu0 0.0
        %1281 = vmatprep.subr.mxu0 0.0
        %1282 = vmatpush2.msra.mxu0 0.0
        %1283 = vmatprep.subr.mxu0 0.0
        %1284 = vmatpush2.msra.mxu0 0.0
        %1285 = vmatprep.subr.mxu0 0.0
        %1286 = vmatpush2.msra.mxu0 0.0
        %1287 = vmatprep.subr.mxu0 0.0
        %1288 = vmatpush2.msra.mxu0 0.0
        %1289 = vmatprep.mubr.f32.mxu0 0.0
        %1290 = vmatmul.mubr.f32.gmra.mxu0 %v1214
        %v1291 = vpop.f32.mrf.mxu0
        %v1292 = vadd.f32 0.0, %v1291
        %v1293 = vpop.f32.mrf.mxu0
        %v1294 = vadd.f32 0.0, %v1293
        %1295 = vmatprep.mubr.f32.mxu0 0.0
        %1296 = vmatmul.mubr.f32.gmra.mxu0 %v1217
        %v1297 = vpop.f32.mrf.mxu0
        %v1298 = vadd.f32 0.0, %v1297
        %v1299 = vpop.f32.mrf.mxu0
        %v1300 = vadd.f32 0.0, %v1299
        %1301 = vmatprep.mubr.f32.mxu0 0.0
        %1302 = vmatmul.mubr.f32.gmra.mxu0 %v1220
        %v1303 = vpop.f32.mrf.mxu0
        %v1304 = vadd.f32 0.0, %v1303
        %v1305 = vpop.f32.mrf.mxu0
        %v1306 = vadd.f32 0.0, %v1305
        %1307 = vmatprep.mubr.f32.mxu0 0.0
        %1308 = vmatmul.mubr.f32.gmra.mxu0 %v1223
        %v1309 = vpop.f32.mrf.mxu0
        %v1310 = vadd.f32 0.0, %v1309
        %v1311 = vpop.f32.mrf.mxu0
        %v1312 = vadd.f32 0.0, %v1311
        %1313 = vdwg.mxu0
        %v1314 = vadd.f32 %v1292, %v1294
        %1315 = vadd.xlane.f32.xlu0 %v1314
        %v1316 = vpop.xlane.xlu0 %1315
        %v1317 = vadd.f32 %v1298, %v1300
        %1318 = vadd.xlane.f32.xlu0 %v1317
        %v1319 = vpop.xlane.xlu0 %1318
        %v1320 = vadd.f32 %v1304, %v1306
        %1321 = vadd.xlane.f32.xlu0 %v1320
        %v1322 = vpop.xlane.xlu0 %1321
        %v1323 = vadd.f32 %v1310, %v1312
        %1324 = vadd.xlane.f32.xlu0 %v1323
        %v1325 = vpop.xlane.xlu0 %1324
        %v1326 = vmul.f32 %v1316, %v1012
        %v1327 = vmul.f32 %v1319, %v1012
        %v1328 = vmul.f32 %v1322, %v1012
        %v1329 = vmul.f32 %v1325, %v1012
        %v1330 = vsub.f32 %v1292, %v1326
        %v1331 = vsub.f32 %v1294, %v1326
        %v1332 = vsub.f32 %v1298, %v1327
        %v1333 = vsub.f32 %v1300, %v1327
        %v1334 = vsub.f32 %v1304, %v1328
        %v1335 = vsub.f32 %v1306, %v1328
        %v1336 = vsub.f32 %v1310, %v1329
        %v1337 = vsub.f32 %v1312, %v1329
        %v1338 = vmul.f32 %v1330, %v1330
        %v1339 = vmul.f32 %v1331, %v1331
        %v1340 = vmul.f32 %v1332, %v1332
        %v1341 = vmul.f32 %v1333, %v1333
        %v1342 = vmul.f32 %v1334, %v1334
        %v1343 = vmul.f32 %v1335, %v1335
        %v1344 = vmul.f32 %v1336, %v1336
        %v1345 = vmul.f32 %v1337, %v1337
        %v1346 = vadd.f32 %v1338, %v1339
        %1347 = vadd.xlane.f32.xlu0 %v1346
        %v1348 = vpop.xlane.xlu0 %1347
        %v1349 = vadd.f32 %v1340, %v1341
        %1350 = vadd.xlane.f32.xlu0 %v1349
        %v1351 = vpop.xlane.xlu0 %1350
        %v1352 = vadd.f32 %v1342, %v1343
        %1353 = vadd.xlane.f32.xlu0 %v1352
        %v1354 = vpop.xlane.xlu0 %1353
        %v1355 = vadd.f32 %v1344, %v1345
        %1356 = vadd.xlane.f32.xlu0 %v1355
        %v1357 = vpop.xlane.xlu0 %1356
        %v1358 = vmul.f32 %v1348, %v1012
        %v1359 = vmul.f32 %v1351, %v1012
        %v1360 = vmul.f32 %v1354, %v1012
        %v1361 = vmul.f32 %v1357, %v1012
        %v1362 = vadd.f32 %v1358, 1e-05
        %v1363 = vadd.f32 %v1359, 1e-05
        %v1364 = vadd.f32 %v1360, 1e-05
        %v1365 = vadd.f32 %v1361, 1e-05
        %v1366 = vrsqrt.pop %v1362
        %v1367 = vrsqrt.pop %v1363
        %v1368 = vrsqrt.pop %v1364
        %v1369 = vrsqrt.pop %v1365
        %v1370 = vmul.f32 %v1366, %v231
        %v1371 = vmul.f32 %v1367, %v232
        %v1372 = vmul.f32 %v1368, %v233
        %v1373 = vmul.f32 %v1369, %v234
        %1375 = vset.pattern.permute.xlu0 4
        %1376 = vperm.xlu0 %1375, %v1370
        %v1377 = vpop.permute.xlu0 %1376
        %1380 = vset.pattern.permute.xlu0 4
        %1381 = vperm.xlu0 %1380, %v1371
        %v1382 = vpop.permute.xlu0 %1381
        %1385 = vset.pattern.permute.xlu0 4
        %1386 = vperm.xlu0 %1385, %v1372
        %v1387 = vpop.permute.xlu0 %1386
        %1390 = vset.pattern.permute.xlu0 4
        %1391 = vperm.xlu0 %1390, %v1373
        %v1392 = vpop.permute.xlu0 %1391
        %v1394 = vmul.f32 %v1292, %v1377
        %v1395 = vmul.f32 %v1294, %v1377
        %v1396 = vmul.f32 %v1298, %v1382
        %v1397 = vmul.f32 %v1300, %v1382
        %v1398 = vmul.f32 %v1304, %v1387
        %v1399 = vmul.f32 %v1306, %v1387
        %v1400 = vmul.f32 %v1310, %v1392
        %v1401 = vmul.f32 %v1312, %v1392
        %v1402 = vmul.f32 %v1326, %v1370
        %v1403 = vmul.f32 %v1327, %v1371
        %v1404 = vmul.f32 %v1328, %v1372
        %v1405 = vmul.f32 %v1329, %v1373
        %1410 = vrot.lane.b32.xlu0 %v1402, 1
        %v1411 = vpop.permute.xlu0 %1410
        %1412 = vrot.lane.b32.xlu0 %v1403, 1
        %v1413 = vpop.permute.xlu0 %1412
        %1414 = vrot.lane.b32.xlu0 %v1404, 1
        %v1415 = vpop.permute.xlu0 %1414
        %1416 = vrot.lane.b32.xlu0 %v1405, 1
        %v1417 = vpop.permute.xlu0 %1416
        %v1422 = vsub.f32 %v231, %v1411
        %v1423 = vsub.f32 %v232, %v1413
        %v1424 = vsub.f32 %v233, %v1415
        %v1425 = vsub.f32 %v234, %v1417
        %1427 = vset.pattern.permute.xlu0 5
        %1428 = vperm.xlu0 %1427, %v1422
        %v1429 = vpop.permute.xlu0 %1428
        %1432 = vset.pattern.permute.xlu0 5
        %1433 = vperm.xlu0 %1432, %v1423
        %v1434 = vpop.permute.xlu0 %1433
        %1437 = vset.pattern.permute.xlu0 5
        %1438 = vperm.xlu0 %1437, %v1424
        %v1439 = vpop.permute.xlu0 %1438
        %1442 = vset.pattern.permute.xlu0 5
        %1443 = vperm.xlu0 %1442, %v1425
        %v1444 = vpop.permute.xlu0 %1443
        %v1446 = vadd.f32 %v1394, %v1429
        %v1447 = vadd.f32 %v1395, %v1429
        %v1448 = vadd.f32 %v1396, %v1434
        %v1449 = vadd.f32 %v1397, %v1434
        %v1450 = vadd.f32 %v1398, %v1439
        %v1451 = vadd.f32 %v1399, %v1439
        %v1452 = vadd.f32 %v1400, %v1444
        %v1453 = vadd.f32 %v1401, %v1444
        %v1454 = vadd.f32 %v1446, %v204
        %v1455 = vadd.f32 %v1447, %v205
        %v1456 = vadd.f32 %v1448, %v206
        %v1457 = vadd.f32 %v1449, %v207
        %v1458 = vadd.f32 %v1450, %v208
        %v1459 = vadd.f32 %v1451, %v209
        %v1460 = vadd.f32 %v1452, %v210
        %v1461 = vadd.f32 %v1453, %v211
        %v1462 = vmul.f32 %v1454, 0.5
        %v1463 = vmul.f32 %v1455, 0.5
        %v1464 = vmul.f32 %v1456, 0.5
        %v1465 = vmul.f32 %v1457, 0.5
        %v1466 = vmul.f32 %v1458, 0.5
        %v1467 = vmul.f32 %v1459, 0.5
        %v1468 = vmul.f32 %v1460, 0.5
        %v1469 = vmul.f32 %v1461, 0.5
        %v1470 = vmul.f32 %v1454, 0.044715
        %v1471 = vmul.f32 %v1455, 0.044715
        %v1472 = vmul.f32 %v1456, 0.044715
        %v1473 = vmul.f32 %v1457, 0.044715
        %v1474 = vmul.f32 %v1458, 0.044715
        %v1475 = vmul.f32 %v1459, 0.044715
        %v1476 = vmul.f32 %v1460, 0.044715
        %v1477 = vmul.f32 %v1461, 0.044715
        %v1478 = vmul.f32 %v1470, %v1454
        %v1479 = vmul.f32 %v1471, %v1455
        %v1480 = vmul.f32 %v1472, %v1456
        %v1481 = vmul.f32 %v1473, %v1457
        %v1482 = vmul.f32 %v1474, %v1458
        %v1483 = vmul.f32 %v1475, %v1459
        %v1484 = vmul.f32 %v1476, %v1460
        %v1485 = vmul.f32 %v1477, %v1461
        %v1486 = vmul.f32 %v1478, %v1454
        %v1487 = vmul.f32 %v1479, %v1455
        %v1488 = vmul.f32 %v1480, %v1456
        %v1489 = vmul.f32 %v1481, %v1457
        %v1490 = vmul.f32 %v1482, %v1458
        %v1491 = vmul.f32 %v1483, %v1459
        %v1492 = vmul.f32 %v1484, %v1460
        %v1493 = vmul.f32 %v1485, %v1461
        %v1494 = vadd.f32 %v1454, %v1486
        %v1495 = vadd.f32 %v1455, %v1487
        %v1496 = vadd.f32 %v1456, %v1488
        %v1497 = vadd.f32 %v1457, %v1489
        %v1498 = vadd.f32 %v1458, %v1490
        %v1499 = vadd.f32 %v1459, %v1491
        %v1500 = vadd.f32 %v1460, %v1492
        %v1501 = vadd.f32 %v1461, %v1493
        %v1502 = vmul.f32 %v1494, 0.7978846
        %v1503 = vmul.f32 %v1495, 0.7978846
        %v1504 = vmul.f32 %v1496, 0.7978846
        %v1505 = vmul.f32 %v1497, 0.7978846
        %v1506 = vmul.f32 %v1498, 0.7978846
        %v1507 = vmul.f32 %v1499, 0.7978846
        %v1508 = vmul.f32 %v1500, 0.7978846
        %v1509 = vmul.f32 %v1501, 0.7978846
        %v1510 = vtanh.pop %v1502
        %v1511 = vtanh.pop %v1503
        %v1512 = vtanh.pop %v1504
        %v1513 = vtanh.pop %v1505
        %v1514 = vtanh.pop %v1506
        %v1515 = vtanh.pop %v1507
        %v1516 = vtanh.pop %v1508
        %v1517 = vtanh.pop %v1509
        %v1518 = vadd.f32 %v1510, 1.0
        %v1519 = vadd.f32 %v1511, 1.0
        %v1520 = vadd.f32 %v1512, 1.0
        %v1521 = vadd.f32 %v1513, 1.0
        %v1522 = vadd.f32 %v1514, 1.0
        %v1523 = vadd.f32 %v1515, 1.0
        %v1524 = vadd.f32 %v1516, 1.0
        %v1525 = vadd.f32 %v1517, 1.0
        %v1526 = vmul.f32 %v1462, %v1518
        %v1527 = vmul.f32 %v1463, %v1519
        %v1528 = vmul.f32 %v1464, %v1520
        %v1529 = vmul.f32 %v1465, %v1521
        %v1530 = vmul.f32 %v1466, %v1522
        %v1531 = vmul.f32 %v1467, %v1523
        %v1532 = vmul.f32 %v1468, %v1524
        %v1533 = vmul.f32 %v1469, %v1525
        %1534 = vst [vmem:[%s203] sm:$0xff] %v1526
        %1535 = vst [vmem:[%s203 + $0x8] sm:$0xff] %v1527
        %1536 = vst [vmem:[%s203 + $0x10] sm:$0xff] %v1528
        %1537 = vst [vmem:[%s203 + $0x18] sm:$0xff] %v1529
        %1538 = vst [vmem:[%s203 + $0x20] sm:$0xff] %v1530
        %1539 = vst [vmem:[%s203 + $0x28] sm:$0xff] %v1531
        %1540 = vst [vmem:[%s203 + $0x30] sm:$0xff] %v1532
        %1541 = vst [vmem:[%s203 + $0x38] sm:$0xff] %v1533
        %s1542 = sand.u32 %s97, 1
        %s1543 = scalar_lea.sflag [#allocation4], %s1542
        %s1544 = sand.u32 %s97, 1
        %s1545 = smul.addr %s1544, 64
        %s1546 = scalar_lea.vmem [#allocation7], %s1545
        // Predicated region
        $region41: #{tpu_custom_call.1} parent=31 // pred_check
          %p1547 = pneg %p107
        $region42: #{tpu_custom_call.1} parent=31 // pred_check_branch
          %1549 = sbr.rel (%p1547) target = $region44
        $region43: #{tpu_custom_call.1} parent=31 // pred_region
          %s1551 = ssub.s32 1024, 1024
          %1552 = vsyncadd %s1543, %s1551
          %s1553 = smul.addr %s21, 8
          %s1554 = smul.addr %s1553, 128
          %s1555 = scalar_lea.hbm %s3, %s1554
          %s1556 = sshll.u32 %s1546, 4
          %s1557 = int_to_ptr.vmem [resolvable:$true] %s1556
          %1562 = dma.vmem_to_hbm [thread:$0]  %s1557, 1024, %s1555, %s1543, 256, 256, 16
        $region44: #{tpu_custom_call.1} parent=31 // pred_fallthru
          _
      $region32: #{tpu_custom_call.1} parent=5 // pred_fallthru
        _
      %p1563 = scmp.le.s32.totalorder 2, %s16
      // Predicated region
      $region45: #{tpu_custom_call.1} parent=5 // pred_check
        %p1564 = pneg %p1563
      $region46: #{tpu_custom_call.1} parent=5 // pred_check_branch
        %1566 = sbr.rel (%p1564) target = $region48
      $region47: #{tpu_custom_call.1} parent=5 // pred_region
        %s1567 = ssub.s32 %s16, 2
        // Predicated region
        $region49: #{tpu_custom_call.1} parent=47 // pred_check
          %p1568 = pneg %p113
        $region50: #{tpu_custom_call.1} parent=47 // pred_check_branch
          %1570 = sbr.rel (%p1568) target = $region52
        $region51: #{tpu_custom_call.1} parent=47 // pred_region
          %s1571 = sand.u32 %s98, 1
          %s1572 = scalar_lea.sflag [#allocation4], %s1571
          %s1573 = sand.u32 %s98, 1
          %s1574 = smul.addr %s1573, 64
          %s1575 = scalar_lea.vmem [#allocation7], %s1574
          %1576 = dma.done %s1572, 1024
        $region52: #{tpu_custom_call.1} parent=47 // pred_fallthru
          _
      $region48: #{tpu_custom_call.1} parent=5 // pred_fallthru
        _
    $region6: #{tpu_custom_call.1} parent=1 // loop_footer
      %s20 = sadd.s32 1, %s16
    $region7: #{tpu_custom_call.1} parent=1 // loop_footer_branch
      %15 = sbr.rel target = $region3
    $region8: #{tpu_custom_call.1} parent=1 // loop_exit
      _
    %1577 = vsyncpa [#allocation3], 1
    %s1578 = scalar_lea.sflag [#allocation3], 1
    %1579 = vsyncpa %s1578, 1
    %1580 = vsyncpa [#allocation6], 1
    %1581 = vsyncpa [#allocation4], 1
    %s1582 = scalar_lea.sflag [#allocation4], 1
    %1583 = vsyncpa %s1582, 1

</llo_original>
